<compile_context>
chip_gen: v5e
topology: v5e:2x2
jax: 0.10.0
libtpu: 0.0.40
codegen_flags: <defaults>
</compile_context>

<pallas_src>
import functools

import jax
import jax.numpy as jnp
from jax.experimental import pallas as pl
from jax.experimental.pallas import tpu as pltpu

EPS = 1e-5
LANES = 128
HIDDEN = (512, 256, 128, 64)


def _round_up(n, m):
    return ((n + m - 1) // m) * m


def mlp_kernel(x_ref, w1, w2, w3, w4, w5, pk, o_ref):
    """Fused MLP forward.

    pk is the packed f32 parameter block (9, >=512):
      rows 0..7 = [g1, be1, g2, be2, g3, be3, g4, be4]  (zero-padded lanes)
      row  8    = b5 (zero-padded; only the first out_pad lanes are used)
    """
    batch = x_ref.shape[0]
    inv_b = 1.0 / batch
    # Row of ones reused by every layer's MXU-based batch reduction.
    ones_row = jnp.ones((1, batch), jnp.float32)

    def bn_relu(h, layer):
        # h: (B, N) f32 matmul output.  Training-mode BN (biased batch var)
        # fused with ReLU.  Axis-0 reductions run as tiny f32 matmuls on the
        # MXU; the VPU only does the centered/normalize/ReLU elementwise work.
        n = h.shape[1]
        g = pk[2 * layer:2 * layer + 1, :n]
        be = pk[2 * layer + 1:2 * layer + 2, :n]
        mean = jnp.dot(ones_row, h, preferred_element_type=jnp.float32) * inv_b
        centered = h - mean
        var = jnp.dot(ones_row, centered * centered,
                      preferred_element_type=jnp.float32) * inv_b
        scale = g * jax.lax.rsqrt(var + EPS)
        # Emit next layer's activation directly in bf16 (stats stay f32).
        return jnp.maximum(centered * scale + be, 0.0).astype(jnp.bfloat16)

    def dot(h_bf16, w_ref):
        # MXU matmul: bf16 inputs, f32 accumulation.
        return jnp.dot(h_bf16, w_ref[...], preferred_element_type=jnp.float32)

    h = x_ref[...].astype(jnp.bfloat16)
    # Pre-BN Linear biases omitted: training-mode BN cancels them exactly.
    h = bn_relu(dot(h, w1), 0)
    h = bn_relu(dot(h, w2), 1)
    h = bn_relu(dot(h, w3), 2)
    h = bn_relu(dot(h, w4), 3)
    out_pad = o_ref.shape[1]
    b5 = pk[8:9, :out_pad]
    # Output padded to a 128-lane multiple -> single lane-dense, unmasked store.
    o_ref[...] = dot(h, w5) + b5


def prepare_params(params, output_dim):
    """One-time conversion of f32 module params into the kernel's inference
    layout: bf16 (in, out) weights, the final layer zero-padded to a 128-lane
    multiple, and all BN gamma/beta + b5 packed into a single f32 block."""
    out_pad = _round_up(output_dim, LANES)
    pack_w = max(HIDDEN[0], out_pad)

    prep = {f"w{i}": params[f"w{i}"].astype(jnp.bfloat16) for i in range(1, 5)}
    w5 = jnp.zeros((params["w5"].shape[0], out_pad), jnp.bfloat16)
    prep["w5"] = w5.at[:, :output_dim].set(params["w5"].astype(jnp.bfloat16))

    pk = jnp.zeros((9, pack_w), jnp.float32)
    for i, n in enumerate(HIDDEN):
        pk = pk.at[2 * i, :n].set(params[f"g{i + 1}"].reshape(n))
        pk = pk.at[2 * i + 1, :n].set(params[f"be{i + 1}"].reshape(n))
    pk = pk.at[8, :output_dim].set(params["b5"].reshape(output_dim))
    prep["pk"] = pk
    return prep


@functools.partial(jax.jit, static_argnames=("out_dim",))
def base_model_forward(x, prep, out_dim):
    batch, in_dim = x.shape
    out_pad = prep["w5"].shape[1]

    flat_params = [prep["w1"], prep["w2"], prep["w3"], prep["w4"], prep["w5"],
                   prep["pk"]]
    n_in = 1 + len(flat_params)

    mm_flops = 2 * batch * (in_dim * HIDDEN[0] + HIDDEN[0] * HIDDEN[1]
                            + HIDDEN[1] * HIDDEN[2] + HIDDEN[2] * HIDDEN[3]
                            + HIDDEN[3] * out_pad)
    bn_flops = 4 * batch * sum(HIDDEN)  # two ones(1,B)@(B,N) per BN layer
    bytes_accessed = (x.size * x.dtype.itemsize
                      + sum(int(p.size) * p.dtype.itemsize for p in flat_params)
                      + batch * out_pad * 4)
    cost = pl.CostEstimate(flops=mm_flops + bn_flops,
                           transcendentals=0,
                           bytes_accessed=bytes_accessed)

    out_padded = pl.pallas_call(
        mlp_kernel,
        out_shape=jax.ShapeDtypeStruct((batch, out_pad), jnp.float32),
        in_specs=[pl.BlockSpec(memory_space=pltpu.VMEM)] * n_in,
        out_specs=pl.BlockSpec(memory_space=pltpu.VMEM),
        cost_estimate=cost,
    )(x, *flat_params)
    return out_padded[:, :out_dim]


def init_params(key, input_dim, output_dim):
    dims = [input_dim, 512, 256, 128, 64, output_dim]
    params = {}
    keys = jax.random.split(key, 2 * (len(dims) - 1))
    for i in range(len(dims) - 1):
        fan_in, fan_out = dims[i], dims[i + 1]
        bound = 1.0 / jnp.sqrt(fan_in)
        # PyTorch nn.Linear default init: U(-1/sqrt(fan_in), 1/sqrt(fan_in))
        w = jax.random.uniform(keys[2 * i], (fan_in, fan_out),
                               minval=-bound, maxval=bound, dtype=jnp.float32)
        b = jax.random.uniform(keys[2 * i + 1], (1, fan_out),
                               minval=-bound, maxval=bound, dtype=jnp.float32)
        params[f"w{i + 1}"] = w
        params[f"b{i + 1}"] = b
        if i < len(dims) - 2:  # BN layers only after hidden1..hidden4
            params[f"g{i + 1}"] = jnp.ones((1, fan_out), jnp.float32)
            params[f"be{i + 1}"] = jnp.zeros((1, fan_out), jnp.float32)
    return params


def reference_forward(x, params):
    # Pure-f32 reference matching the PyTorch module in .train() mode
    # (including the pre-BN biases, which training-mode BN cancels).
    h = x
    for i in range(1, 5):
        h = h @ params[f"w{i}"] + params[f"b{i}"]
        mean = jnp.mean(h, axis=0, keepdims=True)
        var = jnp.mean((h - mean) ** 2, axis=0, keepdims=True)
        h = (h - mean) / jnp.sqrt(var + EPS) * params[f"g{i}"] + params[f"be{i}"]
        h = jnp.maximum(h, 0.0)
    return h @ params["w5"] + params["b5"]


if __name__ == "__main__":
    input_dim = 32
    output_dim = 16
    batch = 128  # keeps the MXU M dimension fed; still a small test shape.

    key = jax.random.PRNGKey(0)
    pkey, xkey = jax.random.split(key)
    params = init_params(pkey, input_dim, output_dim)
    x = jax.random.normal(xkey, (batch, input_dim), dtype=jnp.float32)

    # One-time parameter prep (cast/pad/pack) -- NOT part of the forward path.
    prep = prepare_params(params, output_dim)

    out = base_model_forward(x, prep, output_dim)
    out = jax.block_until_ready(out)

    ref = reference_forward(x, params)
    assert out.shape == (batch, output_dim)
    # Accuracy contract: bf16 MXU inputs / bf16 inter-layer activations =>
    # looser tolerance vs the pure-f32 reference (inference-grade).
    max_err = float(jnp.max(jnp.abs(out - ref)))
    assert jnp.allclose(out, ref, atol=5e-2, rtol=5e-2), max_err
    print("KERNEL_OK")
</pallas_src>

<mosaic_0001>
module attributes {stable_mosaic.version = 11 : i64} {
  func.func @mlp_kernel(%arg0: memref<128x32xf32, #tpu.memory_space<vmem>>, %arg1: memref<32x512xbf16, #tpu.memory_space<vmem>>, %arg2: memref<512x256xbf16, #tpu.memory_space<vmem>>, %arg3: memref<256x128xbf16, #tpu.memory_space<vmem>>, %arg4: memref<128x64xbf16, #tpu.memory_space<vmem>>, %arg5: memref<64x128xbf16, #tpu.memory_space<vmem>>, %arg6: memref<9x512xf32, #tpu.memory_space<vmem>>, %arg7: memref<128x128xf32, #tpu.memory_space<vmem>>) attributes {dimension_semantics = [], scalar_prefetch = 0 : i64, scratch_operands = 0 : i64, tpu.core_type = #tpu.core_type<tc>} {
    %cst = arith.constant 1.000000e+00 : f32
    %0 = vector.broadcast %cst : f32 to vector<1x128xf32>
    %c0 = arith.constant 0 : index
    %c0_0 = arith.constant 0 : index
    %1 = vector.load %arg0[%c0, %c0_0] : memref<128x32xf32, #tpu.memory_space<vmem>>, vector<128x32xf32>
    %2 = arith.truncf %1 : vector<128x32xf32> to vector<128x32xbf16>
    %c0_1 = arith.constant 0 : index
    %c0_2 = arith.constant 0 : index
    %3 = vector.load %arg1[%c0_1, %c0_2] : memref<32x512xbf16, #tpu.memory_space<vmem>>, vector<32x512xbf16>
    %cst_3 = arith.constant dense<0.000000e+00> : vector<128x512xf32>
    %4 = tpu.matmul %2, %3, %cst_3 {dimension_numbers = #tpu.dot_dimension_numbers<[1], [0], [0], [1], [0, 0, 1, 1], [], []>} : vector<128x32xbf16>, vector<32x512xbf16>, vector<128x512xf32> -> vector<128x512xf32>
    %c0_4 = arith.constant 0 : index
    %c0_5 = arith.constant 0 : index
    %5 = vector.load %arg6[%c0_4, %c0_5] : memref<9x512xf32, #tpu.memory_space<vmem>>, vector<1x512xf32>
    %c1 = arith.constant 1 : index
    %c0_6 = arith.constant 0 : index
    %6 = vector.load %arg6[%c1, %c0_6] : memref<9x512xf32, #tpu.memory_space<vmem>>, vector<1x512xf32>
    %cst_7 = arith.constant dense<0.000000e+00> : vector<1x512xf32>
    %7 = tpu.matmul %0, %4, %cst_7 {dimension_numbers = #tpu.dot_dimension_numbers<[1], [0], [0], [1], [0, 0, 1, 1], [], []>} : vector<1x128xf32>, vector<128x512xf32>, vector<1x512xf32> -> vector<1x512xf32>
    %cst_8 = arith.constant 7.812500e-03 : f32
    %8 = vector.broadcast %cst_8 : f32 to vector<1x512xf32>
    %9 = arith.mulf %7, %8 : vector<1x512xf32>
    %10 = vector.broadcast %9 : vector<1x512xf32> to vector<128x512xf32>
    %11 = arith.subf %4, %10 : vector<128x512xf32>
    %12 = arith.mulf %11, %11 : vector<128x512xf32>
    %cst_9 = arith.constant dense<0.000000e+00> : vector<1x512xf32>
    %13 = tpu.matmul %0, %12, %cst_9 {dimension_numbers = #tpu.dot_dimension_numbers<[1], [0], [0], [1], [0, 0, 1, 1], [], []>} : vector<1x128xf32>, vector<128x512xf32>, vector<1x512xf32> -> vector<1x512xf32>
    %cst_10 = arith.constant 7.812500e-03 : f32
    %14 = vector.broadcast %cst_10 : f32 to vector<1x512xf32>
    %15 = arith.mulf %13, %14 : vector<1x512xf32>
    %cst_11 = arith.constant 9.99999974E-6 : f32
    %16 = vector.broadcast %cst_11 : f32 to vector<1x512xf32>
    %17 = arith.addf %15, %16 : vector<1x512xf32>
    %18 = math.rsqrt %17 : vector<1x512xf32>
    %19 = arith.mulf %5, %18 : vector<1x512xf32>
    %20 = vector.broadcast %19 : vector<1x512xf32> to vector<128x512xf32>
    %21 = arith.mulf %11, %20 : vector<128x512xf32>
    %22 = vector.broadcast %6 : vector<1x512xf32> to vector<128x512xf32>
    %23 = arith.addf %21, %22 : vector<128x512xf32>
    %cst_12 = arith.constant 0.000000e+00 : f32
    %24 = vector.broadcast %cst_12 : f32 to vector<128x512xf32>
    %25 = arith.maximumf %23, %24 : vector<128x512xf32>
    %26 = arith.truncf %25 : vector<128x512xf32> to vector<128x512xbf16>
    %c0_13 = arith.constant 0 : index
    %c0_14 = arith.constant 0 : index
    %27 = vector.load %arg2[%c0_13, %c0_14] : memref<512x256xbf16, #tpu.memory_space<vmem>>, vector<512x256xbf16>
    %cst_15 = arith.constant dense<0.000000e+00> : vector<128x256xf32>
    %28 = tpu.matmul %26, %27, %cst_15 {dimension_numbers = #tpu.dot_dimension_numbers<[1], [0], [0], [1], [0, 0, 1, 1], [], []>} : vector<128x512xbf16>, vector<512x256xbf16>, vector<128x256xf32> -> vector<128x256xf32>
    %c2 = arith.constant 2 : index
    %c0_16 = arith.constant 0 : index
    %29 = vector.load %arg6[%c2, %c0_16] : memref<9x512xf32, #tpu.memory_space<vmem>>, vector<1x256xf32>
    %c3 = arith.constant 3 : index
    %c0_17 = arith.constant 0 : index
    %30 = vector.load %arg6[%c3, %c0_17] : memref<9x512xf32, #tpu.memory_space<vmem>>, vector<1x256xf32>
    %cst_18 = arith.constant dense<0.000000e+00> : vector<1x256xf32>
    %31 = tpu.matmul %0, %28, %cst_18 {dimension_numbers = #tpu.dot_dimension_numbers<[1], [0], [0], [1], [0, 0, 1, 1], [], []>} : vector<1x128xf32>, vector<128x256xf32>, vector<1x256xf32> -> vector<1x256xf32>
    %cst_19 = arith.constant 7.812500e-03 : f32
    %32 = vector.broadcast %cst_19 : f32 to vector<1x256xf32>
    %33 = arith.mulf %31, %32 : vector<1x256xf32>
    %34 = vector.broadcast %33 : vector<1x256xf32> to vector<128x256xf32>
    %35 = arith.subf %28, %34 : vector<128x256xf32>
    %36 = arith.mulf %35, %35 : vector<128x256xf32>
    %cst_20 = arith.constant dense<0.000000e+00> : vector<1x256xf32>
    %37 = tpu.matmul %0, %36, %cst_20 {dimension_numbers = #tpu.dot_dimension_numbers<[1], [0], [0], [1], [0, 0, 1, 1], [], []>} : vector<1x128xf32>, vector<128x256xf32>, vector<1x256xf32> -> vector<1x256xf32>
    %cst_21 = arith.constant 7.812500e-03 : f32
    %38 = vector.broadcast %cst_21 : f32 to vector<1x256xf32>
    %39 = arith.mulf %37, %38 : vector<1x256xf32>
    %cst_22 = arith.constant 9.99999974E-6 : f32
    %40 = vector.broadcast %cst_22 : f32 to vector<1x256xf32>
    %41 = arith.addf %39, %40 : vector<1x256xf32>
    %42 = math.rsqrt %41 : vector<1x256xf32>
    %43 = arith.mulf %29, %42 : vector<1x256xf32>
    %44 = vector.broadcast %43 : vector<1x256xf32> to vector<128x256xf32>
    %45 = arith.mulf %35, %44 : vector<128x256xf32>
    %46 = vector.broadcast %30 : vector<1x256xf32> to vector<128x256xf32>
    %47 = arith.addf %45, %46 : vector<128x256xf32>
    %cst_23 = arith.constant 0.000000e+00 : f32
    %48 = vector.broadcast %cst_23 : f32 to vector<128x256xf32>
    %49 = arith.maximumf %47, %48 : vector<128x256xf32>
    %50 = arith.truncf %49 : vector<128x256xf32> to vector<128x256xbf16>
    %c0_24 = arith.constant 0 : index
    %c0_25 = arith.constant 0 : index
    %51 = vector.load %arg3[%c0_24, %c0_25] : memref<256x128xbf16, #tpu.memory_space<vmem>>, vector<256x128xbf16>
    %cst_26 = arith.constant dense<0.000000e+00> : vector<128x128xf32>
    %52 = tpu.matmul %50, %51, %cst_26 {dimension_numbers = #tpu.dot_dimension_numbers<[1], [0], [0], [1], [0, 0, 1, 1], [], []>} : vector<128x256xbf16>, vector<256x128xbf16>, vector<128x128xf32> -> vector<128x128xf32>
    %c4 = arith.constant 4 : index
    %c0_27 = arith.constant 0 : index
    %53 = vector.load %arg6[%c4, %c0_27] : memref<9x512xf32, #tpu.memory_space<vmem>>, vector<1x128xf32>
    %c5 = arith.constant 5 : index
    %c0_28 = arith.constant 0 : index
    %54 = vector.load %arg6[%c5, %c0_28] : memref<9x512xf32, #tpu.memory_space<vmem>>, vector<1x128xf32>
    %cst_29 = arith.constant dense<0.000000e+00> : vector<1x128xf32>
    %55 = tpu.matmul %0, %52, %cst_29 {dimension_numbers = #tpu.dot_dimension_numbers<[1], [0], [0], [1], [0, 0, 1, 1], [], []>} : vector<1x128xf32>, vector<128x128xf32>, vector<1x128xf32> -> vector<1x128xf32>
    %cst_30 = arith.constant 7.812500e-03 : f32
    %56 = vector.broadcast %cst_30 : f32 to vector<1x128xf32>
    %57 = arith.mulf %55, %56 : vector<1x128xf32>
    %58 = vector.broadcast %57 : vector<1x128xf32> to vector<128x128xf32>
    %59 = arith.subf %52, %58 : vector<128x128xf32>
    %60 = arith.mulf %59, %59 : vector<128x128xf32>
    %cst_31 = arith.constant dense<0.000000e+00> : vector<1x128xf32>
    %61 = tpu.matmul %0, %60, %cst_31 {dimension_numbers = #tpu.dot_dimension_numbers<[1], [0], [0], [1], [0, 0, 1, 1], [], []>} : vector<1x128xf32>, vector<128x128xf32>, vector<1x128xf32> -> vector<1x128xf32>
    %cst_32 = arith.constant 7.812500e-03 : f32
    %62 = vector.broadcast %cst_32 : f32 to vector<1x128xf32>
    %63 = arith.mulf %61, %62 : vector<1x128xf32>
    %cst_33 = arith.constant 9.99999974E-6 : f32
    %64 = vector.broadcast %cst_33 : f32 to vector<1x128xf32>
    %65 = arith.addf %63, %64 : vector<1x128xf32>
    %66 = math.rsqrt %65 : vector<1x128xf32>
    %67 = arith.mulf %53, %66 : vector<1x128xf32>
    %68 = vector.broadcast %67 : vector<1x128xf32> to vector<128x128xf32>
    %69 = arith.mulf %59, %68 : vector<128x128xf32>
    %70 = vector.broadcast %54 : vector<1x128xf32> to vector<128x128xf32>
    %71 = arith.addf %69, %70 : vector<128x128xf32>
    %cst_34 = arith.constant 0.000000e+00 : f32
    %72 = vector.broadcast %cst_34 : f32 to vector<128x128xf32>
    %73 = arith.maximumf %71, %72 : vector<128x128xf32>
    %74 = arith.truncf %73 : vector<128x128xf32> to vector<128x128xbf16>
    %c0_35 = arith.constant 0 : index
    %c0_36 = arith.constant 0 : index
    %75 = vector.load %arg4[%c0_35, %c0_36] : memref<128x64xbf16, #tpu.memory_space<vmem>>, vector<128x64xbf16>
    %cst_37 = arith.constant dense<0.000000e+00> : vector<128x64xf32>
    %76 = tpu.matmul %74, %75, %cst_37 {dimension_numbers = #tpu.dot_dimension_numbers<[1], [0], [0], [1], [0, 0, 1, 1], [], []>} : vector<128x128xbf16>, vector<128x64xbf16>, vector<128x64xf32> -> vector<128x64xf32>
    %c6 = arith.constant 6 : index
    %c0_38 = arith.constant 0 : index
    %77 = vector.load %arg6[%c6, %c0_38] : memref<9x512xf32, #tpu.memory_space<vmem>>, vector<1x64xf32>
    %c7 = arith.constant 7 : index
    %c0_39 = arith.constant 0 : index
    %78 = vector.load %arg6[%c7, %c0_39] : memref<9x512xf32, #tpu.memory_space<vmem>>, vector<1x64xf32>
    %cst_40 = arith.constant dense<0.000000e+00> : vector<1x64xf32>
    %79 = tpu.matmul %0, %76, %cst_40 {dimension_numbers = #tpu.dot_dimension_numbers<[1], [0], [0], [1], [0, 0, 1, 1], [], []>} : vector<1x128xf32>, vector<128x64xf32>, vector<1x64xf32> -> vector<1x64xf32>
    %cst_41 = arith.constant 7.812500e-03 : f32
    %80 = vector.broadcast %cst_41 : f32 to vector<1x64xf32>
    %81 = arith.mulf %79, %80 : vector<1x64xf32>
    %82 = vector.broadcast %81 : vector<1x64xf32> to vector<128x64xf32>
    %83 = arith.subf %76, %82 : vector<128x64xf32>
    %84 = arith.mulf %83, %83 : vector<128x64xf32>
    %cst_42 = arith.constant dense<0.000000e+00> : vector<1x64xf32>
    %85 = tpu.matmul %0, %84, %cst_42 {dimension_numbers = #tpu.dot_dimension_numbers<[1], [0], [0], [1], [0, 0, 1, 1], [], []>} : vector<1x128xf32>, vector<128x64xf32>, vector<1x64xf32> -> vector<1x64xf32>
    %cst_43 = arith.constant 7.812500e-03 : f32
    %86 = vector.broadcast %cst_43 : f32 to vector<1x64xf32>
    %87 = arith.mulf %85, %86 : vector<1x64xf32>
    %cst_44 = arith.constant 9.99999974E-6 : f32
    %88 = vector.broadcast %cst_44 : f32 to vector<1x64xf32>
    %89 = arith.addf %87, %88 : vector<1x64xf32>
    %90 = math.rsqrt %89 : vector<1x64xf32>
    %91 = arith.mulf %77, %90 : vector<1x64xf32>
    %92 = vector.broadcast %91 : vector<1x64xf32> to vector<128x64xf32>
    %93 = arith.mulf %83, %92 : vector<128x64xf32>
    %94 = vector.broadcast %78 : vector<1x64xf32> to vector<128x64xf32>
    %95 = arith.addf %93, %94 : vector<128x64xf32>
    %cst_45 = arith.constant 0.000000e+00 : f32
    %96 = vector.broadcast %cst_45 : f32 to vector<128x64xf32>
    %97 = arith.maximumf %95, %96 : vector<128x64xf32>
    %98 = arith.truncf %97 : vector<128x64xf32> to vector<128x64xbf16>
    %c8 = arith.constant 8 : index
    %c0_46 = arith.constant 0 : index
    %99 = vector.load %arg6[%c8, %c0_46] : memref<9x512xf32, #tpu.memory_space<vmem>>, vector<1x128xf32>
    %c0_47 = arith.constant 0 : index
    %c0_48 = arith.constant 0 : index
    %100 = vector.load %arg5[%c0_47, %c0_48] : memref<64x128xbf16, #tpu.memory_space<vmem>>, vector<64x128xbf16>
    %cst_49 = arith.constant dense<0.000000e+00> : vector<128x128xf32>
    %101 = tpu.matmul %98, %100, %cst_49 {dimension_numbers = #tpu.dot_dimension_numbers<[1], [0], [0], [1], [0, 0, 1, 1], [], []>} : vector<128x64xbf16>, vector<64x128xbf16>, vector<128x128xf32> -> vector<128x128xf32>
    %102 = vector.broadcast %99 : vector<1x128xf32> to vector<128x128xf32>
    %103 = arith.addf %101, %102 : vector<128x128xf32>
    %c0_50 = arith.constant 0 : index
    %c0_51 = arith.constant 0 : index
    %104 = vector.load %arg7[%c0_50, %c0_51] : memref<128x128xf32, #tpu.memory_space<vmem>>, vector<128x128xf32>
    tpu.vector_store %arg7[%c0_50, %c0_51], %103 {strides = array<i32>} : memref<128x128xf32, #tpu.memory_space<vmem>>, vector<128x128xf32>,
    return
  }
}

</mosaic_0001>

<llo_original>
// kernel: base_model_forward.1
$region0: #{base_model_forward.1}
  #allocation0 [shape = 'u32[]', space=smem, size = 0x4, offset = 0x4, fixed_abs, tag = 'smem constant byte address 0x4 - core index']
  #allocation1 [shape = 'u32[72,128]{1,0:T(1,128)}', space=vmem, size = 0x9000, scoped, tag = 'internal scratch']
  %s0 = inlined_call_operand.vmem [shape: f32[128,32], index: 0, kind: input, shape index: {}]
  %s1 = inlined_call_operand.vmem [shape: bf16[32,512], index: 1, kind: input, shape index: {}]
  %s2 = inlined_call_operand.hbm [shape: bf16[512,256], index: 2, kind: input, shape index: {}]
  %s3 = inlined_call_operand.vmem [shape: bf16[256,128], index: 3, kind: input, shape index: {}]
  %s4 = inlined_call_operand.vmem [shape: bf16[128,64], index: 4, kind: input, shape index: {}]
  %s5 = inlined_call_operand.hbm [shape: bf16[64,128], index: 5, kind: input, shape index: {}]
  %s6 = inlined_call_operand.vmem [shape: f32[9,512], index: 6, kind: input, shape index: {}]
  %s7 = inlined_call_operand.vmem [shape: f32[128,128], index: 7, kind: output, shape index: {}]
  %s8 = sld [smem:[#allocation0]]
  $region46: #{base_model_forward.1} parent=0
    _
  %s10 = ssub.s32 1, %s8
  %s11 = scalar_select 0, %s10, %s8
  $region1: #{base_model_forward.1} parent=0
    #allocation2 [shape = 'u8[262144]{0}', space=vmem, size = 0x40000, scoped, tag = 'input window, operand 2, single buffered']
    #allocation3 [shape = 's32[1]{0}', space=sflag, size = 0x4, scoped, tag = 'scoped memory for base_model_forward.1']
    #allocation4 [shape = 'u8[16384]{0}', space=vmem, size = 0x4000, scoped, tag = 'input window, operand 5, single buffered']
    #allocation5 [shape = 's32[1]{0}', space=sflag, size = 0x4, scoped, tag = 'scoped memory for base_model_forward.1']
    %12 = vsyncpa [#allocation3], 0
    %13 = vsyncpa [#allocation5], 0
    // Predicated region
    $region2: #{base_model_forward.1} parent=1 // pred_check
      _
    $region3: #{base_model_forward.1} parent=1 // pred_check_branch
      %15 = sbr.rel (0) target = $region5
    $region4: #{base_model_forward.1} parent=1 // pred_region
      _
    $region5: #{base_model_forward.1} parent=1 // pred_fallthru
      _
    // Predicated region
    $region6: #{base_model_forward.1} parent=1 // pred_check
      _
    $region7: #{base_model_forward.1} parent=1 // pred_check_branch
      %17 = sbr.rel (0) target = $region9
    $region8: #{base_model_forward.1} parent=1 // pred_region
      _
    $region9: #{base_model_forward.1} parent=1 // pred_fallthru
      _
    // Predicated region
    $region10: #{base_model_forward.1} parent=1 // pred_check
      _
    $region11: #{base_model_forward.1} parent=1 // pred_check_branch
      %19 = sbr.rel (0) target = $region13
    $region12: #{base_model_forward.1} parent=1 // pred_region
      %21 = vsyncadd [#allocation3], 0
      %s22 = sshll.u32 %s2, 4
      %s23 = int_to_ptr.hbm [resolvable:$true] %s22
      %s24 = sshll.u32 [#allocation2], 4
      %s25 = int_to_ptr.vmem [resolvable:$true] %s24
      %30 = dma.hbm_to_vmem [thread:$0]  %s23, 8192, %s25, [#allocation3], 128, 128, 8
    $region13: #{base_model_forward.1} parent=1 // pred_fallthru
      _
    // Predicated region
    $region14: #{base_model_forward.1} parent=1 // pred_check
      _
    $region15: #{base_model_forward.1} parent=1 // pred_check_branch
      %32 = sbr.rel (0) target = $region17
    $region16: #{base_model_forward.1} parent=1 // pred_region
      _
    $region17: #{base_model_forward.1} parent=1 // pred_fallthru
      _
    // Predicated region
    $region18: #{base_model_forward.1} parent=1 // pred_check
      _
    $region19: #{base_model_forward.1} parent=1 // pred_check_branch
      %34 = sbr.rel (0) target = $region21
    $region20: #{base_model_forward.1} parent=1 // pred_region
      _
    $region21: #{base_model_forward.1} parent=1 // pred_fallthru
      _
    // Predicated region
    $region22: #{base_model_forward.1} parent=1 // pred_check
      _
    $region23: #{base_model_forward.1} parent=1 // pred_check_branch
      %36 = sbr.rel (0) target = $region25
    $region24: #{base_model_forward.1} parent=1 // pred_region
      %38 = vsyncadd [#allocation5], 0
      %s39 = sshll.u32 %s5, 4
      %s40 = int_to_ptr.hbm [resolvable:$true] %s39
      %s41 = sshll.u32 [#allocation4], 4
      %s42 = int_to_ptr.vmem [resolvable:$true] %s41
      %47 = dma.hbm_to_vmem [thread:$0]  %s40, 512, %s42, [#allocation5], 64, 64, 4
    $region25: #{base_model_forward.1} parent=1 // pred_fallthru
      _
    // Predicated region
    $region26: #{base_model_forward.1} parent=1 // pred_check
      _
    $region27: #{base_model_forward.1} parent=1 // pred_check_branch
      %49 = sbr.rel (0) target = $region29
    $region28: #{base_model_forward.1} parent=1 // pred_region
      _
    $region29: #{base_model_forward.1} parent=1 // pred_fallthru
      _
    // Predicated region
    $region30: #{base_model_forward.1} parent=1 // pred_check
      _
    $region31: #{base_model_forward.1} parent=1 // pred_check_branch
      %51 = sbr.rel (0) target = $region33
    $region32: #{base_model_forward.1} parent=1 // pred_region
      %53 = dma.done [#allocation3], 8192
    $region33: #{base_model_forward.1} parent=1 // pred_fallthru
      _
    // Predicated region
    $region34: #{base_model_forward.1} parent=1 // pred_check
      _
    $region35: #{base_model_forward.1} parent=1 // pred_check_branch
      %55 = sbr.rel (0) target = $region37
    $region36: #{base_model_forward.1} parent=1 // pred_region
      %57 = dma.done [#allocation5], 512
    $region37: #{base_model_forward.1} parent=1 // pred_fallthru
      _
    %v59 = vld [vmem:[%s0] sm:$0xff]
    %v60 = vld [vmem:[%s0 + $0x8] sm:$0xff]
    %v61 = vld [vmem:[%s0 + $0x10] sm:$0xff]
    %v62 = vld [vmem:[%s0 + $0x18] sm:$0xff]
    %v63 = vld [vmem:[%s0 + $0x20] sm:$0xff]
    %v64 = vld [vmem:[%s0 + $0x28] sm:$0xff]
    %v65 = vld [vmem:[%s0 + $0x30] sm:$0xff]
    %v66 = vld [vmem:[%s0 + $0x38] sm:$0xff]
    %v67 = vld [vmem:[%s0 + $0x40] sm:$0xff]
    %v68 = vld [vmem:[%s0 + $0x48] sm:$0xff]
    %v69 = vld [vmem:[%s0 + $0x50] sm:$0xff]
    %v70 = vld [vmem:[%s0 + $0x58] sm:$0xff]
    %v71 = vld [vmem:[%s0 + $0x60] sm:$0xff]
    %v72 = vld [vmem:[%s0 + $0x68] sm:$0xff]
    %v73 = vld [vmem:[%s0 + $0x70] sm:$0xff]
    %v74 = vld [vmem:[%s0 + $0x78] sm:$0xff]
    %v75 = vpack.c.bf16 %v60, %v59
    %v76 = vpack.c.bf16 %v62, %v61
    %v77 = vpack.c.bf16 %v64, %v63
    %v78 = vpack.c.bf16 %v66, %v65
    %v79 = vpack.c.bf16 %v68, %v67
    %v80 = vpack.c.bf16 %v70, %v69
    %v81 = vpack.c.bf16 %v72, %v71
    %v82 = vpack.c.bf16 %v74, %v73
    %v83 = vld [vmem:[%s1] sm:$0xff]
    %v84 = vld [vmem:[%s1 + $0x8] sm:$0xff]
    %v85 = vld [vmem:[%s1 + $0x10] sm:$0xff]
    %v86 = vld [vmem:[%s1 + $0x18] sm:$0xff]
    %v87 = vld [vmem:[%s1 + $0x20] sm:$0xff]
    %v88 = vld [vmem:[%s1 + $0x28] sm:$0xff]
    %v89 = vld [vmem:[%s1 + $0x30] sm:$0xff]
    %v90 = vld [vmem:[%s1 + $0x38] sm:$0xff]
    %v99 = vunpack.c.l.b16 %v83
    %v100 = vunpack.c.h.b16 %v83
    %v101 = vunpack.c.l.b16 %v84
    %v102 = vunpack.c.h.b16 %v84
    %v103 = vunpack.c.l.b16 %v85
    %v104 = vunpack.c.h.b16 %v85
    %v105 = vunpack.c.l.b16 %v86
    %v106 = vunpack.c.h.b16 %v86
    %v107 = vunpack.c.l.b16 %v87
    %v108 = vunpack.c.h.b16 %v87
    %v109 = vunpack.c.l.b16 %v88
    %v110 = vunpack.c.h.b16 %v88
    %v111 = vunpack.c.l.b16 %v89
    %v112 = vunpack.c.h.b16 %v89
    %v113 = vunpack.c.l.b16 %v90
    %v114 = vunpack.c.h.b16 %v90
    %v115 = vpack.c.b16 %v103, %v99
    %v116 = vpack.c.b16 %v104, %v100
    %v117 = vpack.c.b16 %v105, %v101
    %v118 = vpack.c.b16 %v106, %v102
    %v119 = vpack.c.b16 %v111, %v107
    %v120 = vpack.c.b16 %v112, %v108
    %v121 = vpack.c.b16 %v113, %v109
    %v122 = vpack.c.b16 %v114, %v110
    %vm131 = vcmask 261120
    %v133 = vsel %vm131, %v75, 0
    %v136 = vsel %vm131, %v76, 0
    %v139 = vsel %vm131, %v77, 0
    %v142 = vsel %vm131, %v78, 0
    %v145 = vsel %vm131, %v79, 0
    %v148 = vsel %vm131, %v80, 0
    %v151 = vsel %vm131, %v81, 0
    %v154 = vsel %vm131, %v82, 0
    %156 = vmatpush.bf16.msra.mxu0 0
    %157 = vmatpush.bf16.msra.mxu0 0
    %158 = vmatpush.bf16.msra.mxu0 0
    %159 = vmatpush.bf16.msra.mxu0 0
    %160 = vmatpush.bf16.msra.mxu0 0
    %161 = vmatpush.bf16.msra.mxu0 0
    %162 = vmatpush.bf16.msra.mxu0 %v119
    %163 = vmatpush.bf16.msra.mxu0 %v115
    %164 = vmatmul.bf16.gmra.mxu0 %v133
    %v165 = vpop.f32.mrf.mxu0
    %v166 = vadd.f32 0.0, %v165
    %v167 = vpop.f32.mrf.mxu0
    %v168 = vadd.f32 0.0, %v167
    %169 = vmatmul.bf16.gmra.mxu0 %v136
    %v170 = vpop.f32.mrf.mxu0
    %v171 = vadd.f32 0.0, %v170
    %v172 = vpop.f32.mrf.mxu0
    %v173 = vadd.f32 0.0, %v172
    %174 = vmatmul.bf16.gmra.mxu0 %v139
    %v175 = vpop.f32.mrf.mxu0
    %v176 = vadd.f32 0.0, %v175
    %v177 = vpop.f32.mrf.mxu0
    %v178 = vadd.f32 0.0, %v177
    %179 = vmatmul.bf16.gmra.mxu0 %v142
    %v180 = vpop.f32.mrf.mxu0
    %v181 = vadd.f32 0.0, %v180
    %v182 = vpop.f32.mrf.mxu0
    %v183 = vadd.f32 0.0, %v182
    %184 = vmatmul.bf16.gmra.mxu0 %v145
    %v185 = vpop.f32.mrf.mxu0
    %v186 = vadd.f32 0.0, %v185
    %v187 = vpop.f32.mrf.mxu0
    %v188 = vadd.f32 0.0, %v187
    %189 = vmatmul.bf16.gmra.mxu0 %v148
    %v190 = vpop.f32.mrf.mxu0
    %v191 = vadd.f32 0.0, %v190
    %v192 = vpop.f32.mrf.mxu0
    %v193 = vadd.f32 0.0, %v192
    %194 = vmatmul.bf16.gmra.mxu0 %v151
    %v195 = vpop.f32.mrf.mxu0
    %v196 = vadd.f32 0.0, %v195
    %v197 = vpop.f32.mrf.mxu0
    %v198 = vadd.f32 0.0, %v197
    %199 = vmatmul.bf16.gmra.mxu0 %v154
    %v200 = vpop.f32.mrf.mxu0
    %v201 = vadd.f32 0.0, %v200
    %v202 = vpop.f32.mrf.mxu0
    %v203 = vadd.f32 0.0, %v202
    %204 = vdwg.mxu0
    %205 = vmatpush.bf16.msra.mxu0 0
    %206 = vmatpush.bf16.msra.mxu0 0
    %207 = vmatpush.bf16.msra.mxu0 0
    %208 = vmatpush.bf16.msra.mxu0 0
    %209 = vmatpush.bf16.msra.mxu0 0
    %210 = vmatpush.bf16.msra.mxu0 0
    %211 = vmatpush.bf16.msra.mxu0 %v120
    %212 = vmatpush.bf16.msra.mxu0 %v116
    %213 = vmatmul.bf16.gmra.mxu0 %v133
    %v214 = vpop.f32.mrf.mxu0
    %v215 = vadd.f32 0.0, %v214
    %v216 = vpop.f32.mrf.mxu0
    %v217 = vadd.f32 0.0, %v216
    %218 = vmatmul.bf16.gmra.mxu0 %v136
    %v219 = vpop.f32.mrf.mxu0
    %v220 = vadd.f32 0.0, %v219
    %v221 = vpop.f32.mrf.mxu0
    %v222 = vadd.f32 0.0, %v221
    %223 = vmatmul.bf16.gmra.mxu0 %v139
    %v224 = vpop.f32.mrf.mxu0
    %v225 = vadd.f32 0.0, %v224
    %v226 = vpop.f32.mrf.mxu0
    %v227 = vadd.f32 0.0, %v226
    %228 = vmatmul.bf16.gmra.mxu0 %v142
    %v229 = vpop.f32.mrf.mxu0
    %v230 = vadd.f32 0.0, %v229
    %v231 = vpop.f32.mrf.mxu0
    %v232 = vadd.f32 0.0, %v231
    %233 = vmatmul.bf16.gmra.mxu0 %v145
    %v234 = vpop.f32.mrf.mxu0
    %v235 = vadd.f32 0.0, %v234
    %v236 = vpop.f32.mrf.mxu0
    %v237 = vadd.f32 0.0, %v236
    %238 = vmatmul.bf16.gmra.mxu0 %v148
    %v239 = vpop.f32.mrf.mxu0
    %v240 = vadd.f32 0.0, %v239
    %v241 = vpop.f32.mrf.mxu0
    %v242 = vadd.f32 0.0, %v241
    %243 = vmatmul.bf16.gmra.mxu0 %v151
    %v244 = vpop.f32.mrf.mxu0
    %v245 = vadd.f32 0.0, %v244
    %v246 = vpop.f32.mrf.mxu0
    %v247 = vadd.f32 0.0, %v246
    %248 = vmatmul.bf16.gmra.mxu0 %v154
    %v249 = vpop.f32.mrf.mxu0
    %v250 = vadd.f32 0.0, %v249
    %v251 = vpop.f32.mrf.mxu0
    %v252 = vadd.f32 0.0, %v251
    %253 = vdwg.mxu0
    %254 = vmatpush.bf16.msra.mxu0 0
    %255 = vmatpush.bf16.msra.mxu0 0
    %256 = vmatpush.bf16.msra.mxu0 0
    %257 = vmatpush.bf16.msra.mxu0 0
    %258 = vmatpush.bf16.msra.mxu0 0
    %259 = vmatpush.bf16.msra.mxu0 0
    %260 = vmatpush.bf16.msra.mxu0 %v121
    %261 = vmatpush.bf16.msra.mxu0 %v117
    %262 = vmatmul.bf16.gmra.mxu0 %v133
    %v263 = vpop.f32.mrf.mxu0
    %v264 = vadd.f32 0.0, %v263
    %v265 = vpop.f32.mrf.mxu0
    %v266 = vadd.f32 0.0, %v265
    %267 = vmatmul.bf16.gmra.mxu0 %v136
    %v268 = vpop.f32.mrf.mxu0
    %v269 = vadd.f32 0.0, %v268
    %v270 = vpop.f32.mrf.mxu0
    %v271 = vadd.f32 0.0, %v270
    %272 = vmatmul.bf16.gmra.mxu0 %v139
    %v273 = vpop.f32.mrf.mxu0
    %v274 = vadd.f32 0.0, %v273
    %v275 = vpop.f32.mrf.mxu0
    %v276 = vadd.f32 0.0, %v275
    %277 = vmatmul.bf16.gmra.mxu0 %v142
    %v278 = vpop.f32.mrf.mxu0
    %v279 = vadd.f32 0.0, %v278
    %v280 = vpop.f32.mrf.mxu0
    %v281 = vadd.f32 0.0, %v280
    %282 = vmatmul.bf16.gmra.mxu0 %v145
    %v283 = vpop.f32.mrf.mxu0
    %v284 = vadd.f32 0.0, %v283
    %v285 = vpop.f32.mrf.mxu0
    %v286 = vadd.f32 0.0, %v285
    %287 = vmatmul.bf16.gmra.mxu0 %v148
    %v288 = vpop.f32.mrf.mxu0
    %v289 = vadd.f32 0.0, %v288
    %v290 = vpop.f32.mrf.mxu0
    %v291 = vadd.f32 0.0, %v290
    %292 = vmatmul.bf16.gmra.mxu0 %v151
    %v293 = vpop.f32.mrf.mxu0
    %v294 = vadd.f32 0.0, %v293
    %v295 = vpop.f32.mrf.mxu0
    %v296 = vadd.f32 0.0, %v295
    %297 = vmatmul.bf16.gmra.mxu0 %v154
    %v298 = vpop.f32.mrf.mxu0
    %v299 = vadd.f32 0.0, %v298
    %v300 = vpop.f32.mrf.mxu0
    %v301 = vadd.f32 0.0, %v300
    %302 = vdwg.mxu0
    %303 = vmatpush.bf16.msra.mxu0 0
    %304 = vmatpush.bf16.msra.mxu0 0
    %305 = vmatpush.bf16.msra.mxu0 0
    %306 = vmatpush.bf16.msra.mxu0 0
    %307 = vmatpush.bf16.msra.mxu0 0
    %308 = vmatpush.bf16.msra.mxu0 0
    %309 = vmatpush.bf16.msra.mxu0 %v122
    %310 = vmatpush.bf16.msra.mxu0 %v118
    %311 = vmatmul.bf16.gmra.mxu0 %v133
    %v312 = vpop.f32.mrf.mxu0
    %v313 = vadd.f32 0.0, %v312
    %v314 = vpop.f32.mrf.mxu0
    %v315 = vadd.f32 0.0, %v314
    %316 = vmatmul.bf16.gmra.mxu0 %v136
    %v317 = vpop.f32.mrf.mxu0
    %v318 = vadd.f32 0.0, %v317
    %v319 = vpop.f32.mrf.mxu0
    %v320 = vadd.f32 0.0, %v319
    %321 = vmatmul.bf16.gmra.mxu0 %v139
    %v322 = vpop.f32.mrf.mxu0
    %v323 = vadd.f32 0.0, %v322
    %v324 = vpop.f32.mrf.mxu0
    %v325 = vadd.f32 0.0, %v324
    %326 = vmatmul.bf16.gmra.mxu0 %v142
    %v327 = vpop.f32.mrf.mxu0
    %v328 = vadd.f32 0.0, %v327
    %v329 = vpop.f32.mrf.mxu0
    %v330 = vadd.f32 0.0, %v329
    %331 = vmatmul.bf16.gmra.mxu0 %v145
    %v332 = vpop.f32.mrf.mxu0
    %v333 = vadd.f32 0.0, %v332
    %v334 = vpop.f32.mrf.mxu0
    %v335 = vadd.f32 0.0, %v334
    %336 = vmatmul.bf16.gmra.mxu0 %v148
    %v337 = vpop.f32.mrf.mxu0
    %v338 = vadd.f32 0.0, %v337
    %v339 = vpop.f32.mrf.mxu0
    %v340 = vadd.f32 0.0, %v339
    %341 = vmatmul.bf16.gmra.mxu0 %v151
    %v342 = vpop.f32.mrf.mxu0
    %v343 = vadd.f32 0.0, %v342
    %v344 = vpop.f32.mrf.mxu0
    %v345 = vadd.f32 0.0, %v344
    %346 = vmatmul.bf16.gmra.mxu0 %v154
    %v347 = vpop.f32.mrf.mxu0
    %v348 = vadd.f32 0.0, %v347
    %v349 = vpop.f32.mrf.mxu0
    %v350 = vadd.f32 0.0, %v349
    %351 = vdwg.mxu0
    %v352 = vld [vmem:[%s6] ss:$8 sm:$0xf]
    %s353 = scalar_lea.vmem %s6, 1
    %v354 = vld [vmem:[%s353] ss:$8 sm:$0xf]
    %355 = vmatpush.msra.mxu0 %v203
    %356 = vmatpush.msra.mxu0 %v201
    %357 = vmatpush.msra.mxu0 %v198
    %358 = vmatpush.msra.mxu0 %v196
    %359 = vmatpush.msra.mxu0 %v193
    %360 = vmatpush.msra.mxu0 %v191
    %361 = vmatpush.msra.mxu0 %v188
    %362 = vmatpush.msra.mxu0 %v186
    %363 = vmatpush.msra.mxu0 %v183
    %364 = vmatpush.msra.mxu0 %v181
    %365 = vmatpush.msra.mxu0 %v178
    %366 = vmatpush.msra.mxu0 %v176
    %367 = vmatpush.msra.mxu0 %v173
    %368 = vmatpush.msra.mxu0 %v171
    %369 = vmatpush.msra.mxu0 %v168
    %370 = vmatpush.msra.mxu0 %v166
    %371 = vmatmul.f32.gmra.mxu0 1.0
    %v372 = vpop.f32.mrf.mxu0
    %v373 = vadd.f32 0.0, %v372
    %374 = vdwg.mxu0
    %375 = vmatpush.msra.mxu0 %v252
    %376 = vmatpush.msra.mxu0 %v250
    %377 = vmatpush.msra.mxu0 %v247
    %378 = vmatpush.msra.mxu0 %v245
    %379 = vmatpush.msra.mxu0 %v242
    %380 = vmatpush.msra.mxu0 %v240
    %381 = vmatpush.msra.mxu0 %v237
    %382 = vmatpush.msra.mxu0 %v235
    %383 = vmatpush.msra.mxu0 %v232
    %384 = vmatpush.msra.mxu0 %v230
    %385 = vmatpush.msra.mxu0 %v227
    %386 = vmatpush.msra.mxu0 %v225
    %387 = vmatpush.msra.mxu0 %v222
    %388 = vmatpush.msra.mxu0 %v220
    %389 = vmatpush.msra.mxu0 %v217
    %390 = vmatpush.msra.mxu0 %v215
    %391 = vmatmul.f32.gmra.mxu0 1.0
    %v392 = vpop.f32.mrf.mxu0
    %v393 = vadd.f32 0.0, %v392
    %394 = vdwg.mxu0
    %395 = vmatpush.msra.mxu0 %v301
    %396 = vmatpush.msra.mxu0 %v299
    %397 = vmatpush.msra.mxu0 %v296
    %398 = vmatpush.msra.mxu0 %v294
    %399 = vmatpush.msra.mxu0 %v291
    %400 = vmatpush.msra.mxu0 %v289
    %401 = vmatpush.msra.mxu0 %v286
    %402 = vmatpush.msra.mxu0 %v284
    %403 = vmatpush.msra.mxu0 %v281
    %404 = vmatpush.msra.mxu0 %v279
    %405 = vmatpush.msra.mxu0 %v276
    %406 = vmatpush.msra.mxu0 %v274
    %407 = vmatpush.msra.mxu0 %v271
    %408 = vmatpush.msra.mxu0 %v269
    %409 = vmatpush.msra.mxu0 %v266
    %410 = vmatpush.msra.mxu0 %v264
    %411 = vmatmul.f32.gmra.mxu0 1.0
    %v412 = vpop.f32.mrf.mxu0
    %v413 = vadd.f32 0.0, %v412
    %414 = vdwg.mxu0
    %415 = vmatpush.msra.mxu0 %v350
    %416 = vmatpush.msra.mxu0 %v348
    %417 = vmatpush.msra.mxu0 %v345
    %418 = vmatpush.msra.mxu0 %v343
    %419 = vmatpush.msra.mxu0 %v340
    %420 = vmatpush.msra.mxu0 %v338
    %421 = vmatpush.msra.mxu0 %v335
    %422 = vmatpush.msra.mxu0 %v333
    %423 = vmatpush.msra.mxu0 %v330
    %424 = vmatpush.msra.mxu0 %v328
    %425 = vmatpush.msra.mxu0 %v325
    %426 = vmatpush.msra.mxu0 %v323
    %427 = vmatpush.msra.mxu0 %v320
    %428 = vmatpush.msra.mxu0 %v318
    %429 = vmatpush.msra.mxu0 %v315
    %430 = vmatpush.msra.mxu0 %v313
    %431 = vmatmul.f32.gmra.mxu0 1.0
    %v432 = vpop.f32.mrf.mxu0
    %v433 = vadd.f32 0.0, %v432
    %434 = vdwg.mxu0
    %v435 = vmul.f32 %v373, 0.0078125
    %v436 = vmul.f32 %v393, 0.0078125
    %v437 = vmul.f32 %v413, 0.0078125
    %v438 = vmul.f32 %v433, 0.0078125
    %v439 = vperm.slane %v435, 0
    %v440 = vperm.slane %v436, 0
    %v441 = vperm.slane %v437, 0
    %v442 = vperm.slane %v438, 0
    %v443 = vsub.f32 %v166, %v439
    %v444 = vsub.f32 %v215, %v440
    %v445 = vsub.f32 %v264, %v441
    %v446 = vsub.f32 %v313, %v442
    %v447 = vsub.f32 %v168, %v439
    %v448 = vsub.f32 %v217, %v440
    %v449 = vsub.f32 %v266, %v441
    %v450 = vsub.f32 %v315, %v442
    %v451 = vsub.f32 %v171, %v439
    %v452 = vsub.f32 %v220, %v440
    %v453 = vsub.f32 %v269, %v441
    %v454 = vsub.f32 %v318, %v442
    %v455 = vsub.f32 %v173, %v439
    %v456 = vsub.f32 %v222, %v440
    %v457 = vsub.f32 %v271, %v441
    %v458 = vsub.f32 %v320, %v442
    %v459 = vsub.f32 %v176, %v439
    %v460 = vsub.f32 %v225, %v440
    %v461 = vsub.f32 %v274, %v441
    %v462 = vsub.f32 %v323, %v442
    %v463 = vsub.f32 %v178, %v439
    %v464 = vsub.f32 %v227, %v440
    %v465 = vsub.f32 %v276, %v441
    %v466 = vsub.f32 %v325, %v442
    %v467 = vsub.f32 %v181, %v439
    %v468 = vsub.f32 %v230, %v440
    %v469 = vsub.f32 %v279, %v441
    %v470 = vsub.f32 %v328, %v442
    %v471 = vsub.f32 %v183, %v439
    %v472 = vsub.f32 %v232, %v440
    %v473 = vsub.f32 %v281, %v441
    %v474 = vsub.f32 %v330, %v442
    %v475 = vsub.f32 %v186, %v439
    %v476 = vsub.f32 %v235, %v440
    %v477 = vsub.f32 %v284, %v441
    %v478 = vsub.f32 %v333, %v442
    %v479 = vsub.f32 %v188, %v439
    %v480 = vsub.f32 %v237, %v440
    %v481 = vsub.f32 %v286, %v441
    %v482 = vsub.f32 %v335, %v442
    %v483 = vsub.f32 %v191, %v439
    %v484 = vsub.f32 %v240, %v440
    %v485 = vsub.f32 %v289, %v441
    %v486 = vsub.f32 %v338, %v442
    %v487 = vsub.f32 %v193, %v439
    %v488 = vsub.f32 %v242, %v440
    %v489 = vsub.f32 %v291, %v441
    %v490 = vsub.f32 %v340, %v442
    %v491 = vsub.f32 %v196, %v439
    %v492 = vsub.f32 %v245, %v440
    %v493 = vsub.f32 %v294, %v441
    %v494 = vsub.f32 %v343, %v442
    %v495 = vsub.f32 %v198, %v439
    %v496 = vsub.f32 %v247, %v440
    %v497 = vsub.f32 %v296, %v441
    %v498 = vsub.f32 %v345, %v442
    %v499 = vsub.f32 %v201, %v439
    %v500 = vsub.f32 %v250, %v440
    %v501 = vsub.f32 %v299, %v441
    %v502 = vsub.f32 %v348, %v442
    %v503 = vsub.f32 %v203, %v439
    %v504 = vsub.f32 %v252, %v440
    %v505 = vsub.f32 %v301, %v441
    %v506 = vsub.f32 %v350, %v442
    %v507 = vmul.f32 %v443, %v443
    %v508 = vmul.f32 %v444, %v444
    %v509 = vmul.f32 %v445, %v445
    %v510 = vmul.f32 %v446, %v446
    %v511 = vmul.f32 %v447, %v447
    %v512 = vmul.f32 %v448, %v448
    %v513 = vmul.f32 %v449, %v449
    %v514 = vmul.f32 %v450, %v450
    %v515 = vmul.f32 %v451, %v451
    %v516 = vmul.f32 %v452, %v452
    %v517 = vmul.f32 %v453, %v453
    %v518 = vmul.f32 %v454, %v454
    %v519 = vmul.f32 %v455, %v455
    %v520 = vmul.f32 %v456, %v456
    %v521 = vmul.f32 %v457, %v457
    %v522 = vmul.f32 %v458, %v458
    %v523 = vmul.f32 %v459, %v459
    %v524 = vmul.f32 %v460, %v460
    %v525 = vmul.f32 %v461, %v461
    %v526 = vmul.f32 %v462, %v462
    %v527 = vmul.f32 %v463, %v463
    %v528 = vmul.f32 %v464, %v464
    %v529 = vmul.f32 %v465, %v465
    %v530 = vmul.f32 %v466, %v466
    %v531 = vmul.f32 %v467, %v467
    %v532 = vmul.f32 %v468, %v468
    %v533 = vmul.f32 %v469, %v469
    %v534 = vmul.f32 %v470, %v470
    %v535 = vmul.f32 %v471, %v471
    %v536 = vmul.f32 %v472, %v472
    %v537 = vmul.f32 %v473, %v473
    %v538 = vmul.f32 %v474, %v474
    %v539 = vmul.f32 %v475, %v475
    %v540 = vmul.f32 %v476, %v476
    %v541 = vmul.f32 %v477, %v477
    %v542 = vmul.f32 %v478, %v478
    %v543 = vmul.f32 %v479, %v479
    %v544 = vmul.f32 %v480, %v480
    %v545 = vmul.f32 %v481, %v481
    %v546 = vmul.f32 %v482, %v482
    %v547 = vmul.f32 %v483, %v483
    %v548 = vmul.f32 %v484, %v484
    %v549 = vmul.f32 %v485, %v485
    %v550 = vmul.f32 %v486, %v486
    %v551 = vmul.f32 %v487, %v487
    %v552 = vmul.f32 %v488, %v488
    %v553 = vmul.f32 %v489, %v489
    %v554 = vmul.f32 %v490, %v490
    %v555 = vmul.f32 %v491, %v491
    %v556 = vmul.f32 %v492, %v492
    %v557 = vmul.f32 %v493, %v493
    %v558 = vmul.f32 %v494, %v494
    %v559 = vmul.f32 %v495, %v495
    %v560 = vmul.f32 %v496, %v496
    %v561 = vmul.f32 %v497, %v497
    %v562 = vmul.f32 %v498, %v498
    %v563 = vmul.f32 %v499, %v499
    %v564 = vmul.f32 %v500, %v500
    %v565 = vmul.f32 %v501, %v501
    %v566 = vmul.f32 %v502, %v502
    %v567 = vmul.f32 %v503, %v503
    %v568 = vmul.f32 %v504, %v504
    %v569 = vmul.f32 %v505, %v505
    %v570 = vmul.f32 %v506, %v506
    %571 = vmatpush.msra.mxu0 %v567
    %572 = vmatpush.msra.mxu0 %v563
    %573 = vmatpush.msra.mxu0 %v559
    %574 = vmatpush.msra.mxu0 %v555
    %575 = vmatpush.msra.mxu0 %v551
    %576 = vmatpush.msra.mxu0 %v547
    %577 = vmatpush.msra.mxu0 %v543
    %578 = vmatpush.msra.mxu0 %v539
    %579 = vmatpush.msra.mxu0 %v535
    %580 = vmatpush.msra.mxu0 %v531
    %581 = vmatpush.msra.mxu0 %v527
    %582 = vmatpush.msra.mxu0 %v523
    %583 = vmatpush.msra.mxu0 %v519
    %584 = vmatpush.msra.mxu0 %v515
    %585 = vmatpush.msra.mxu0 %v511
    %586 = vmatpush.msra.mxu0 %v507
    %587 = vmatmul.f32.gmra.mxu0 1.0
    %v588 = vpop.f32.mrf.mxu0
    %v589 = vadd.f32 0.0, %v588
    %590 = vdwg.mxu0
    %591 = vmatpush.msra.mxu0 %v568
    %592 = vmatpush.msra.mxu0 %v564
    %593 = vmatpush.msra.mxu0 %v560
    %594 = vmatpush.msra.mxu0 %v556
    %595 = vmatpush.msra.mxu0 %v552
    %596 = vmatpush.msra.mxu0 %v548
    %597 = vmatpush.msra.mxu0 %v544
    %598 = vmatpush.msra.mxu0 %v540
    %599 = vmatpush.msra.mxu0 %v536
    %600 = vmatpush.msra.mxu0 %v532
    %601 = vmatpush.msra.mxu0 %v528
    %602 = vmatpush.msra.mxu0 %v524
    %603 = vmatpush.msra.mxu0 %v520
    %604 = vmatpush.msra.mxu0 %v516
    %605 = vmatpush.msra.mxu0 %v512
    %606 = vmatpush.msra.mxu0 %v508
    %607 = vmatmul.f32.gmra.mxu0 1.0
    %v608 = vpop.f32.mrf.mxu0
    %v609 = vadd.f32 0.0, %v608
    %610 = vdwg.mxu0
    %611 = vmatpush.msra.mxu0 %v569
    %612 = vmatpush.msra.mxu0 %v565
    %613 = vmatpush.msra.mxu0 %v561
    %614 = vmatpush.msra.mxu0 %v557
    %615 = vmatpush.msra.mxu0 %v553
    %616 = vmatpush.msra.mxu0 %v549
    %617 = vmatpush.msra.mxu0 %v545
    %618 = vmatpush.msra.mxu0 %v541
    %619 = vmatpush.msra.mxu0 %v537
    %620 = vmatpush.msra.mxu0 %v533
    %621 = vmatpush.msra.mxu0 %v529
    %622 = vmatpush.msra.mxu0 %v525
    %623 = vmatpush.msra.mxu0 %v521
    %624 = vmatpush.msra.mxu0 %v517
    %625 = vmatpush.msra.mxu0 %v513
    %626 = vmatpush.msra.mxu0 %v509
    %627 = vmatmul.f32.gmra.mxu0 1.0
    %v628 = vpop.f32.mrf.mxu0
    %v629 = vadd.f32 0.0, %v628
    %630 = vdwg.mxu0
    %631 = vmatpush.msra.mxu0 %v570
    %632 = vmatpush.msra.mxu0 %v566
    %633 = vmatpush.msra.mxu0 %v562
    %634 = vmatpush.msra.mxu0 %v558
    %635 = vmatpush.msra.mxu0 %v554
    %636 = vmatpush.msra.mxu0 %v550
    %637 = vmatpush.msra.mxu0 %v546
    %638 = vmatpush.msra.mxu0 %v542
    %639 = vmatpush.msra.mxu0 %v538
    %640 = vmatpush.msra.mxu0 %v534
    %641 = vmatpush.msra.mxu0 %v530
    %642 = vmatpush.msra.mxu0 %v526
    %643 = vmatpush.msra.mxu0 %v522
    %644 = vmatpush.msra.mxu0 %v518
    %645 = vmatpush.msra.mxu0 %v514
    %646 = vmatpush.msra.mxu0 %v510
    %647 = vmatmul.f32.gmra.mxu0 1.0
    %v648 = vpop.f32.mrf.mxu0
    %v649 = vadd.f32 0.0, %v648
    %650 = vdwg.mxu0
    %v651 = vmul.f32 %v589, 0.0078125
    %v652 = vmul.f32 %v609, 0.0078125
    %v653 = vmul.f32 %v629, 0.0078125
    %v654 = vmul.f32 %v649, 0.0078125
    %v655 = vadd.f32 %v651, 1e-05
    %v656 = vadd.f32 %v652, 1e-05
    %v657 = vadd.f32 %v653, 1e-05
    %v658 = vadd.f32 %v654, 1e-05
    %v659 = vrsqrt.pop %v655
    %v660 = vmul.f32 %v659, %v655
    %v661 = vmul.f32 %v660, %v659
    %v662 = vmul.f32 0.5, %v661
    %v663 = vsub.f32 1.5, %v662
    %v664 = vmul.f32 %v659, %v663
    %vm665 = vweird.f32 %v655
    %vm666 = vweird.f32 %v659
    %vm667 = vmor %vm665, %vm666
    %v668 = vsel %vm667, %v659, %v664
    %v669 = vrsqrt.pop %v656
    %v670 = vmul.f32 %v669, %v656
    %v671 = vmul.f32 %v670, %v669
    %v672 = vmul.f32 0.5, %v671
    %v673 = vsub.f32 1.5, %v672
    %v674 = vmul.f32 %v669, %v673
    %vm675 = vweird.f32 %v656
    %vm676 = vweird.f32 %v669
    %vm677 = vmor %vm675, %vm676
    %v678 = vsel %vm677, %v669, %v674
    %v679 = vrsqrt.pop %v657
    %v680 = vmul.f32 %v679, %v657
    %v681 = vmul.f32 %v680, %v679
    %v682 = vmul.f32 0.5, %v681
    %v683 = vsub.f32 1.5, %v682
    %v684 = vmul.f32 %v679, %v683
    %vm685 = vweird.f32 %v657
    %vm686 = vweird.f32 %v679
    %vm687 = vmor %vm685, %vm686
    %v688 = vsel %vm687, %v679, %v684
    %v689 = vrsqrt.pop %v658
    %v690 = vmul.f32 %v689, %v658
    %v691 = vmul.f32 %v690, %v689
    %v692 = vmul.f32 0.5, %v691
    %v693 = vsub.f32 1.5, %v692
    %v694 = vmul.f32 %v689, %v693
    %vm695 = vweird.f32 %v658
    %vm696 = vweird.f32 %v689
    %vm697 = vmor %vm695, %vm696
    %v698 = vsel %vm697, %v689, %v694
    %v703 = vrot.slane %v678, 7
    %v704 = vrot.slane %v688, 6
    %v705 = vrot.slane %v698, 5
    %vm706 = vcmask 1040384
    %v707 = vsel %vm706, %v668, %v703
    %vm708 = vcmask 1042434
    %v709 = vsel %vm708, %v704, %v705
    %vm710 = vcmask 1041408
    %v711 = vsel %vm710, %v707, %v709
    %v713 = vmul.f32 %v352, %v711
    %v715 = vperm.slane %v713, 0
    %v716 = vperm.slane %v713, 1
    %v717 = vperm.slane %v713, 2
    %v718 = vperm.slane %v713, 3
    %v723 = vmul.f32 %v443, %v715
    %v724 = vmul.f32 %v444, %v716
    %v725 = vmul.f32 %v445, %v717
    %v726 = vmul.f32 %v446, %v718
    %v727 = vmul.f32 %v447, %v715
    %v728 = vmul.f32 %v448, %v716
    %v729 = vmul.f32 %v449, %v717
    %v730 = vmul.f32 %v450, %v718
    %v731 = vmul.f32 %v451, %v715
    %v732 = vmul.f32 %v452, %v716
    %v733 = vmul.f32 %v453, %v717
    %v734 = vmul.f32 %v454, %v718
    %v735 = vmul.f32 %v455, %v715
    %v736 = vmul.f32 %v456, %v716
    %v737 = vmul.f32 %v457, %v717
    %v738 = vmul.f32 %v458, %v718
    %v739 = vmul.f32 %v459, %v715
    %v740 = vmul.f32 %v460, %v716
    %v741 = vmul.f32 %v461, %v717
    %v742 = vmul.f32 %v462, %v718
    %v743 = vmul.f32 %v463, %v715
    %v744 = vmul.f32 %v464, %v716
    %v745 = vmul.f32 %v465, %v717
    %v746 = vmul.f32 %v466, %v718
    %v747 = vmul.f32 %v467, %v715
    %v748 = vmul.f32 %v468, %v716
    %v749 = vmul.f32 %v469, %v717
    %v750 = vmul.f32 %v470, %v718
    %v751 = vmul.f32 %v471, %v715
    %v752 = vmul.f32 %v472, %v716
    %v753 = vmul.f32 %v473, %v717
    %v754 = vmul.f32 %v474, %v718
    %v755 = vmul.f32 %v475, %v715
    %v756 = vmul.f32 %v476, %v716
    %v757 = vmul.f32 %v477, %v717
    %v758 = vmul.f32 %v478, %v718
    %v759 = vmul.f32 %v479, %v715
    %v760 = vmul.f32 %v480, %v716
    %v761 = vmul.f32 %v481, %v717
    %v762 = vmul.f32 %v482, %v718
    %v763 = vmul.f32 %v483, %v715
    %v764 = vmul.f32 %v484, %v716
    %v765 = vmul.f32 %v485, %v717
    %v766 = vmul.f32 %v486, %v718
    %v767 = vmul.f32 %v487, %v715
    %v768 = vmul.f32 %v488, %v716
    %v769 = vmul.f32 %v489, %v717
    %v770 = vmul.f32 %v490, %v718
    %v771 = vmul.f32 %v491, %v715
    %v772 = vmul.f32 %v492, %v716
    %v773 = vmul.f32 %v493, %v717
    %v774 = vmul.f32 %v494, %v718
    %v775 = vmul.f32 %v495, %v715
    %v776 = vmul.f32 %v496, %v716
    %v777 = vmul.f32 %v497, %v717
    %v778 = vmul.f32 %v498, %v718
    %v779 = vmul.f32 %v499, %v715
    %v780 = vmul.f32 %v500, %v716
    %v781 = vmul.f32 %v501, %v717
    %v782 = vmul.f32 %v502, %v718
    %v783 = vmul.f32 %v503, %v715
    %v784 = vmul.f32 %v504, %v716
    %v785 = vmul.f32 %v505, %v717
    %v786 = vmul.f32 %v506, %v718
    %v788 = vperm.slane %v354, 0
    %v789 = vperm.slane %v354, 1
    %v790 = vperm.slane %v354, 2
    %v791 = vperm.slane %v354, 3
    %v796 = vadd.f32 %v723, %v788
    %v797 = vadd.f32 %v724, %v789
    %v798 = vadd.f32 %v725, %v790
    %v799 = vadd.f32 %v726, %v791
    %v800 = vadd.f32 %v727, %v788
    %v801 = vadd.f32 %v728, %v789
    %v802 = vadd.f32 %v729, %v790
    %v803 = vadd.f32 %v730, %v791
    %v804 = vadd.f32 %v731, %v788
    %v805 = vadd.f32 %v732, %v789
    %v806 = vadd.f32 %v733, %v790
    %v807 = vadd.f32 %v734, %v791
    %v808 = vadd.f32 %v735, %v788
    %v809 = vadd.f32 %v736, %v789
    %v810 = vadd.f32 %v737, %v790
    %v811 = vadd.f32 %v738, %v791
    %v812 = vadd.f32 %v739, %v788
    %v813 = vadd.f32 %v740, %v789
    %v814 = vadd.f32 %v741, %v790
    %v815 = vadd.f32 %v742, %v791
    %v816 = vadd.f32 %v743, %v788
    %v817 = vadd.f32 %v744, %v789
    %v818 = vadd.f32 %v745, %v790
    %v819 = vadd.f32 %v746, %v791
    %v820 = vadd.f32 %v747, %v788
    %v821 = vadd.f32 %v748, %v789
    %v822 = vadd.f32 %v749, %v790
    %v823 = vadd.f32 %v750, %v791
    %v824 = vadd.f32 %v751, %v788
    %v825 = vadd.f32 %v752, %v789
    %v826 = vadd.f32 %v753, %v790
    %v827 = vadd.f32 %v754, %v791
    %v828 = vadd.f32 %v755, %v788
    %v829 = vadd.f32 %v756, %v789
    %v830 = vadd.f32 %v757, %v790
    %v831 = vadd.f32 %v758, %v791
    %v832 = vadd.f32 %v759, %v788
    %v833 = vadd.f32 %v760, %v789
    %v834 = vadd.f32 %v761, %v790
    %v835 = vadd.f32 %v762, %v791
    %v836 = vadd.f32 %v763, %v788
    %v837 = vadd.f32 %v764, %v789
    %v838 = vadd.f32 %v765, %v790
    %v839 = vadd.f32 %v766, %v791
    %v840 = vadd.f32 %v767, %v788
    %v841 = vadd.f32 %v768, %v789
    %v842 = vadd.f32 %v769, %v790
    %v843 = vadd.f32 %v770, %v791
    %v844 = vadd.f32 %v771, %v788
    %v845 = vadd.f32 %v772, %v789
    %v846 = vadd.f32 %v773, %v790
    %v847 = vadd.f32 %v774, %v791
    %v848 = vadd.f32 %v775, %v788
    %v849 = vadd.f32 %v776, %v789
    %v850 = vadd.f32 %v777, %v790
    %v851 = vadd.f32 %v778, %v791
    %v852 = vadd.f32 %v779, %v788
    %v853 = vadd.f32 %v780, %v789
    %v854 = vadd.f32 %v781, %v790
    %v855 = vadd.f32 %v782, %v791
    %v856 = vadd.f32 %v783, %v788
    %v857 = vadd.f32 %v784, %v789
    %v858 = vadd.f32 %v785, %v790
    %v859 = vadd.f32 %v786, %v791
    %v860 = vmax.f32 %v796, 0.0
    %v861 = vmax.f32 %v797, 0.0
    %v862 = vmax.f32 %v798, 0.0
    %v863 = vmax.f32 %v799, 0.0
    %v864 = vmax.f32 %v800, 0.0
    %v865 = vmax.f32 %v801, 0.0
    %v866 = vmax.f32 %v802, 0.0
    %v867 = vmax.f32 %v803, 0.0
    %v868 = vmax.f32 %v804, 0.0
    %v869 = vmax.f32 %v805, 0.0
    %v870 = vmax.f32 %v806, 0.0
    %v871 = vmax.f32 %v807, 0.0
    %v872 = vmax.f32 %v808, 0.0
    %v873 = vmax.f32 %v809, 0.0
    %v874 = vmax.f32 %v810, 0.0
    %v875 = vmax.f32 %v811, 0.0
    %v876 = vmax.f32 %v812, 0.0
    %v877 = vmax.f32 %v813, 0.0
    %v878 = vmax.f32 %v814, 0.0
    %v879 = vmax.f32 %v815, 0.0
    %v880 = vmax.f32 %v816, 0.0
    %v881 = vmax.f32 %v817, 0.0
    %v882 = vmax.f32 %v818, 0.0
    %v883 = vmax.f32 %v819, 0.0
    %v884 = vmax.f32 %v820, 0.0
    %v885 = vmax.f32 %v821, 0.0
    %v886 = vmax.f32 %v822, 0.0
    %v887 = vmax.f32 %v823, 0.0
    %v888 = vmax.f32 %v824, 0.0
    %v889 = vmax.f32 %v825, 0.0
    %v890 = vmax.f32 %v826, 0.0
    %v891 = vmax.f32 %v827, 0.0
    %v892 = vmax.f32 %v828, 0.0
    %v893 = vmax.f32 %v829, 0.0
    %v894 = vmax.f32 %v830, 0.0
    %v895 = vmax.f32 %v831, 0.0
    %v896 = vmax.f32 %v832, 0.0
    %v897 = vmax.f32 %v833, 0.0
    %v898 = vmax.f32 %v834, 0.0
    %v899 = vmax.f32 %v835, 0.0
    %v900 = vmax.f32 %v836, 0.0
    %v901 = vmax.f32 %v837, 0.0
    %v902 = vmax.f32 %v838, 0.0
    %v903 = vmax.f32 %v839, 0.0
    %v904 = vmax.f32 %v840, 0.0
    %v905 = vmax.f32 %v841, 0.0
    %v906 = vmax.f32 %v842, 0.0
    %v907 = vmax.f32 %v843, 0.0
    %v908 = vmax.f32 %v844, 0.0
    %v909 = vmax.f32 %v845, 0.0
    %v910 = vmax.f32 %v846, 0.0
    %v911 = vmax.f32 %v847, 0.0
    %v912 = vmax.f32 %v848, 0.0
    %v913 = vmax.f32 %v849, 0.0
    %v914 = vmax.f32 %v850, 0.0
    %v915 = vmax.f32 %v851, 0.0
    %v916 = vmax.f32 %v852, 0.0
    %v917 = vmax.f32 %v853, 0.0
    %v918 = vmax.f32 %v854, 0.0
    %v919 = vmax.f32 %v855, 0.0
    %v920 = vmax.f32 %v856, 0.0
    %v921 = vmax.f32 %v857, 0.0
    %v922 = vmax.f32 %v858, 0.0
    %v923 = vmax.f32 %v859, 0.0
    %v924 = vpack.c.bf16 %v864, %v860
    %v925 = vpack.c.bf16 %v865, %v861
    %v926 = vpack.c.bf16 %v866, %v862
    %v927 = vpack.c.bf16 %v867, %v863
    %v928 = vpack.c.bf16 %v872, %v868
    %v929 = vpack.c.bf16 %v873, %v869
    %v930 = vpack.c.bf16 %v874, %v870
    %v931 = vpack.c.bf16 %v875, %v871
    %v932 = vpack.c.bf16 %v880, %v876
    %v933 = vpack.c.bf16 %v881, %v877
    %v934 = vpack.c.bf16 %v882, %v878
    %v935 = vpack.c.bf16 %v883, %v879
    %v936 = vpack.c.bf16 %v888, %v884
    %v937 = vpack.c.bf16 %v889, %v885
    %v938 = vpack.c.bf16 %v890, %v886
    %v939 = vpack.c.bf16 %v891, %v887
    %v940 = vpack.c.bf16 %v896, %v892
    %v941 = vpack.c.bf16 %v897, %v893
    %v942 = vpack.c.bf16 %v898, %v894
    %v943 = vpack.c.bf16 %v899, %v895
    %v944 = vpack.c.bf16 %v904, %v900
    %v945 = vpack.c.bf16 %v905, %v901
    %v946 = vpack.c.bf16 %v906, %v902
    %v947 = vpack.c.bf16 %v907, %v903
    %v948 = vpack.c.bf16 %v912, %v908
    %v949 = vpack.c.bf16 %v913, %v909
    %v950 = vpack.c.bf16 %v914, %v910
    %v951 = vpack.c.bf16 %v915, %v911
    %v952 = vpack.c.bf16 %v920, %v916
    %v953 = vpack.c.bf16 %v921, %v917
    %v954 = vpack.c.bf16 %v922, %v918
    %v955 = vpack.c.bf16 %v923, %v919
    %v956 = vld [vmem:[#allocation2] sm:$0xff]
    %v957 = vld [vmem:[#allocation2 + $0x8] sm:$0xff]
    %v958 = vld [vmem:[#allocation2 + $0x10] sm:$0xff]
    %v959 = vld [vmem:[#allocation2 + $0x18] sm:$0xff]
    %v960 = vld [vmem:[#allocation2 + $0x20] sm:$0xff]
    %v961 = vld [vmem:[#allocation2 + $0x28] sm:$0xff]
    %v962 = vld [vmem:[#allocation2 + $0x30] sm:$0xff]
    %v963 = vld [vmem:[#allocation2 + $0x38] sm:$0xff]
    %v964 = vld [vmem:[#allocation2 + $0x40] sm:$0xff]
    %v965 = vld [vmem:[#allocation2 + $0x48] sm:$0xff]
    %v966 = vld [vmem:[#allocation2 + $0x50] sm:$0xff]
    %v967 = vld [vmem:[#allocation2 + $0x58] sm:$0xff]
    %v968 = vld [vmem:[#allocation2 + $0x60] sm:$0xff]
    %v969 = vld [vmem:[#allocation2 + $0x68] sm:$0xff]
    %v970 = vld [vmem:[#allocation2 + $0x70] sm:$0xff]
    %v971 = vld [vmem:[#allocation2 + $0x78] sm:$0xff]
    %v972 = vld [vmem:[#allocation2 + $0x80] sm:$0xff]
    %v973 = vld [vmem:[#allocation2 + $0x88] sm:$0xff]
    %v974 = vld [vmem:[#allocation2 + $0x90] sm:$0xff]
    %v975 = vld [vmem:[#allocation2 + $0x98] sm:$0xff]
    %v976 = vld [vmem:[#allocation2 + $0xa0] sm:$0xff]
    %v977 = vld [vmem:[#allocation2 + $0xa8] sm:$0xff]
    %v978 = vld [vmem:[#allocation2 + $0xb0] sm:$0xff]
    %v979 = vld [vmem:[#allocation2 + $0xb8] sm:$0xff]
    %v980 = vld [vmem:[#allocation2 + $0xc0] sm:$0xff]
    %v981 = vld [vmem:[#allocation2 + $0xc8] sm:$0xff]
    %v982 = vld [vmem:[#allocation2 + $0xd0] sm:$0xff]
    %v983 = vld [vmem:[#allocation2 + $0xd8] sm:$0xff]
    %v984 = vld [vmem:[#allocation2 + $0xe0] sm:$0xff]
    %v985 = vld [vmem:[#allocation2 + $0xe8] sm:$0xff]
    %v986 = vld [vmem:[#allocation2 + $0xf0] sm:$0xff]
    %v987 = vld [vmem:[#allocation2 + $0xf8] sm:$0xff]
    %v988 = vld [vmem:[#allocation2 + $0x100] sm:$0xff]
    %v989 = vld [vmem:[#allocation2 + $0x108] sm:$0xff]
    %v990 = vld [vmem:[#allocation2 + $0x110] sm:$0xff]
    %v991 = vld [vmem:[#allocation2 + $0x118] sm:$0xff]
    %v992 = vld [vmem:[#allocation2 + $0x120] sm:$0xff]
    %v993 = vld [vmem:[#allocation2 + $0x128] sm:$0xff]
    %v994 = vld [vmem:[#allocation2 + $0x130] sm:$0xff]
    %v995 = vld [vmem:[#allocation2 + $0x138] sm:$0xff]
    %v996 = vld [vmem:[#allocation2 + $0x140] sm:$0xff]
    %v997 = vld [vmem:[#allocation2 + $0x148] sm:$0xff]
    %v998 = vld [vmem:[#allocation2 + $0x150] sm:$0xff]
    %v999 = vld [vmem:[#allocation2 + $0x158] sm:$0xff]
    %v1000 = vld [vmem:[#allocation2 + $0x160] sm:$0xff]
    %v1001 = vld [vmem:[#allocation2 + $0x168] sm:$0xff]
    %v1002 = vld [vmem:[#allocation2 + $0x170] sm:$0xff]
    %v1003 = vld [vmem:[#allocation2 + $0x178] sm:$0xff]
    %v1004 = vld [vmem:[#allocation2 + $0x180] sm:$0xff]
    %v1005 = vld [vmem:[#allocation2 + $0x188] sm:$0xff]
    %v1006 = vld [vmem:[#allocation2 + $0x190] sm:$0xff]
    %v1007 = vld [vmem:[#allocation2 + $0x198] sm:$0xff]
    %v1008 = vld [vmem:[#allocation2 + $0x1a0] sm:$0xff]
    %v1009 = vld [vmem:[#allocation2 + $0x1a8] sm:$0xff]
    %v1010 = vld [vmem:[#allocation2 + $0x1b0] sm:$0xff]
    %v1011 = vld [vmem:[#allocation2 + $0x1b8] sm:$0xff]
    %v1012 = vld [vmem:[#allocation2 + $0x1c0] sm:$0xff]
    %v1013 = vld [vmem:[#allocation2 + $0x1c8] sm:$0xff]
    %v1014 = vld [vmem:[#allocation2 + $0x1d0] sm:$0xff]
    %v1015 = vld [vmem:[#allocation2 + $0x1d8] sm:$0xff]
    %v1016 = vld [vmem:[#allocation2 + $0x1e0] sm:$0xff]
    %v1017 = vld [vmem:[#allocation2 + $0x1e8] sm:$0xff]
    %v1018 = vld [vmem:[#allocation2 + $0x1f0] sm:$0xff]
    %v1019 = vld [vmem:[#allocation2 + $0x1f8] sm:$0xff]
    %v1084 = vunpack.c.l.b16 %v956
    %v1085 = vunpack.c.h.b16 %v956
    %v1086 = vunpack.c.l.b16 %v957
    %v1087 = vunpack.c.h.b16 %v957
    %v1088 = vunpack.c.l.b16 %v958
    %v1089 = vunpack.c.h.b16 %v958
    %v1090 = vunpack.c.l.b16 %v959
    %v1091 = vunpack.c.h.b16 %v959
    %v1092 = vunpack.c.l.b16 %v960
    %v1093 = vunpack.c.h.b16 %v960
    %v1094 = vunpack.c.l.b16 %v961
    %v1095 = vunpack.c.h.b16 %v961
    %v1096 = vunpack.c.l.b16 %v962
    %v1097 = vunpack.c.h.b16 %v962
    %v1098 = vunpack.c.l.b16 %v963
    %v1099 = vunpack.c.h.b16 %v963
    %v1100 = vunpack.c.l.b16 %v964
    %v1101 = vunpack.c.h.b16 %v964
    %v1102 = vunpack.c.l.b16 %v965
    %v1103 = vunpack.c.h.b16 %v965
    %v1104 = vunpack.c.l.b16 %v966
    %v1105 = vunpack.c.h.b16 %v966
    %v1106 = vunpack.c.l.b16 %v967
    %v1107 = vunpack.c.h.b16 %v967
    %v1108 = vunpack.c.l.b16 %v968
    %v1109 = vunpack.c.h.b16 %v968
    %v1110 = vunpack.c.l.b16 %v969
    %v1111 = vunpack.c.h.b16 %v969
    %v1112 = vunpack.c.l.b16 %v970
    %v1113 = vunpack.c.h.b16 %v970
    %v1114 = vunpack.c.l.b16 %v971
    %v1115 = vunpack.c.h.b16 %v971
    %v1116 = vunpack.c.l.b16 %v972
    %v1117 = vunpack.c.h.b16 %v972
    %v1118 = vunpack.c.l.b16 %v973
    %v1119 = vunpack.c.h.b16 %v973
    %v1120 = vunpack.c.l.b16 %v974
    %v1121 = vunpack.c.h.b16 %v974
    %v1122 = vunpack.c.l.b16 %v975
    %v1123 = vunpack.c.h.b16 %v975
    %v1124 = vunpack.c.l.b16 %v976
    %v1125 = vunpack.c.h.b16 %v976
    %v1126 = vunpack.c.l.b16 %v977
    %v1127 = vunpack.c.h.b16 %v977
    %v1128 = vunpack.c.l.b16 %v978
    %v1129 = vunpack.c.h.b16 %v978
    %v1130 = vunpack.c.l.b16 %v979
    %v1131 = vunpack.c.h.b16 %v979
    %v1132 = vunpack.c.l.b16 %v980
    %v1133 = vunpack.c.h.b16 %v980
    %v1134 = vunpack.c.l.b16 %v981
    %v1135 = vunpack.c.h.b16 %v981
    %v1136 = vunpack.c.l.b16 %v982
    %v1137 = vunpack.c.h.b16 %v982
    %v1138 = vunpack.c.l.b16 %v983
    %v1139 = vunpack.c.h.b16 %v983
    %v1140 = vunpack.c.l.b16 %v984
    %v1141 = vunpack.c.h.b16 %v984
    %v1142 = vunpack.c.l.b16 %v985
    %v1143 = vunpack.c.h.b16 %v985
    %v1144 = vunpack.c.l.b16 %v986
    %v1145 = vunpack.c.h.b16 %v986
    %v1146 = vunpack.c.l.b16 %v987
    %v1147 = vunpack.c.h.b16 %v987
    %v1148 = vunpack.c.l.b16 %v988
    %v1149 = vunpack.c.h.b16 %v988
    %v1150 = vunpack.c.l.b16 %v989
    %v1151 = vunpack.c.h.b16 %v989
    %v1152 = vunpack.c.l.b16 %v990
    %v1153 = vunpack.c.h.b16 %v990
    %v1154 = vunpack.c.l.b16 %v991
    %v1155 = vunpack.c.h.b16 %v991
    %v1156 = vunpack.c.l.b16 %v992
    %v1157 = vunpack.c.h.b16 %v992
    %v1158 = vunpack.c.l.b16 %v993
    %v1159 = vunpack.c.h.b16 %v993
    %v1160 = vunpack.c.l.b16 %v994
    %v1161 = vunpack.c.h.b16 %v994
    %v1162 = vunpack.c.l.b16 %v995
    %v1163 = vunpack.c.h.b16 %v995
    %v1164 = vunpack.c.l.b16 %v996
    %v1165 = vunpack.c.h.b16 %v996
    %v1166 = vunpack.c.l.b16 %v997
    %v1167 = vunpack.c.h.b16 %v997
    %v1168 = vunpack.c.l.b16 %v998
    %v1169 = vunpack.c.h.b16 %v998
    %v1170 = vunpack.c.l.b16 %v999
    %v1171 = vunpack.c.h.b16 %v999
    %v1172 = vunpack.c.l.b16 %v1000
    %v1173 = vunpack.c.h.b16 %v1000
    %v1174 = vunpack.c.l.b16 %v1001
    %v1175 = vunpack.c.h.b16 %v1001
    %v1176 = vunpack.c.l.b16 %v1002
    %v1177 = vunpack.c.h.b16 %v1002
    %v1178 = vunpack.c.l.b16 %v1003
    %v1179 = vunpack.c.h.b16 %v1003
    %v1180 = vunpack.c.l.b16 %v1004
    %v1181 = vunpack.c.h.b16 %v1004
    %v1182 = vunpack.c.l.b16 %v1005
    %v1183 = vunpack.c.h.b16 %v1005
    %v1184 = vunpack.c.l.b16 %v1006
    %v1185 = vunpack.c.h.b16 %v1006
    %v1186 = vunpack.c.l.b16 %v1007
    %v1187 = vunpack.c.h.b16 %v1007
    %v1188 = vunpack.c.l.b16 %v1008
    %v1189 = vunpack.c.h.b16 %v1008
    %v1190 = vunpack.c.l.b16 %v1009
    %v1191 = vunpack.c.h.b16 %v1009
    %v1192 = vunpack.c.l.b16 %v1010
    %v1193 = vunpack.c.h.b16 %v1010
    %v1194 = vunpack.c.l.b16 %v1011
    %v1195 = vunpack.c.h.b16 %v1011
    %v1196 = vunpack.c.l.b16 %v1012
    %v1197 = vunpack.c.h.b16 %v1012
    %v1198 = vunpack.c.l.b16 %v1013
    %v1199 = vunpack.c.h.b16 %v1013
    %v1200 = vunpack.c.l.b16 %v1014
    %v1201 = vunpack.c.h.b16 %v1014
    %v1202 = vunpack.c.l.b16 %v1015
    %v1203 = vunpack.c.h.b16 %v1015
    %v1204 = vunpack.c.l.b16 %v1016
    %v1205 = vunpack.c.h.b16 %v1016
    %v1206 = vunpack.c.l.b16 %v1017
    %v1207 = vunpack.c.h.b16 %v1017
    %v1208 = vunpack.c.l.b16 %v1018
    %v1209 = vunpack.c.h.b16 %v1018
    %v1210 = vunpack.c.l.b16 %v1019
    %v1211 = vunpack.c.h.b16 %v1019
    %v1212 = vpack.c.b16 %v1086, %v1084
    %v1213 = vpack.c.b16 %v1087, %v1085
    %v1214 = vpack.c.b16 %v1090, %v1088
    %v1215 = vpack.c.b16 %v1091, %v1089
    %v1216 = vpack.c.b16 %v1094, %v1092
    %v1217 = vpack.c.b16 %v1095, %v1093
    %v1218 = vpack.c.b16 %v1098, %v1096
    %v1219 = vpack.c.b16 %v1099, %v1097
    %v1220 = vpack.c.b16 %v1102, %v1100
    %v1221 = vpack.c.b16 %v1103, %v1101
    %v1222 = vpack.c.b16 %v1106, %v1104
    %v1223 = vpack.c.b16 %v1107, %v1105
    %v1224 = vpack.c.b16 %v1110, %v1108
    %v1225 = vpack.c.b16 %v1111, %v1109
    %v1226 = vpack.c.b16 %v1114, %v1112
    %v1227 = vpack.c.b16 %v1115, %v1113
    %v1228 = vpack.c.b16 %v1118, %v1116
    %v1229 = vpack.c.b16 %v1119, %v1117
    %v1230 = vpack.c.b16 %v1122, %v1120
    %v1231 = vpack.c.b16 %v1123, %v1121
    %v1232 = vpack.c.b16 %v1126, %v1124
    %v1233 = vpack.c.b16 %v1127, %v1125
    %v1234 = vpack.c.b16 %v1130, %v1128
    %v1235 = vpack.c.b16 %v1131, %v1129
    %v1236 = vpack.c.b16 %v1134, %v1132
    %v1237 = vpack.c.b16 %v1135, %v1133
    %v1238 = vpack.c.b16 %v1138, %v1136
    %v1239 = vpack.c.b16 %v1139, %v1137
    %v1240 = vpack.c.b16 %v1142, %v1140
    %v1241 = vpack.c.b16 %v1143, %v1141
    %v1242 = vpack.c.b16 %v1146, %v1144
    %v1243 = vpack.c.b16 %v1147, %v1145
    %v1244 = vpack.c.b16 %v1150, %v1148
    %v1245 = vpack.c.b16 %v1151, %v1149
    %v1246 = vpack.c.b16 %v1154, %v1152
    %v1247 = vpack.c.b16 %v1155, %v1153
    %v1248 = vpack.c.b16 %v1158, %v1156
    %v1249 = vpack.c.b16 %v1159, %v1157
    %v1250 = vpack.c.b16 %v1162, %v1160
    %v1251 = vpack.c.b16 %v1163, %v1161
    %v1252 = vpack.c.b16 %v1166, %v1164
    %v1253 = vpack.c.b16 %v1167, %v1165
    %v1254 = vpack.c.b16 %v1170, %v1168
    %v1255 = vpack.c.b16 %v1171, %v1169
    %v1256 = vpack.c.b16 %v1174, %v1172
    %v1257 = vpack.c.b16 %v1175, %v1173
    %v1258 = vpack.c.b16 %v1178, %v1176
    %v1259 = vpack.c.b16 %v1179, %v1177
    %v1260 = vpack.c.b16 %v1182, %v1180
    %v1261 = vpack.c.b16 %v1183, %v1181
    %v1262 = vpack.c.b16 %v1186, %v1184
    %v1263 = vpack.c.b16 %v1187, %v1185
    %v1264 = vpack.c.b16 %v1190, %v1188
    %v1265 = vpack.c.b16 %v1191, %v1189
    %v1266 = vpack.c.b16 %v1194, %v1192
    %v1267 = vpack.c.b16 %v1195, %v1193
    %v1268 = vpack.c.b16 %v1198, %v1196
    %v1269 = vpack.c.b16 %v1199, %v1197
    %v1270 = vpack.c.b16 %v1202, %v1200
    %v1271 = vpack.c.b16 %v1203, %v1201
    %v1272 = vpack.c.b16 %v1206, %v1204
    %v1273 = vpack.c.b16 %v1207, %v1205
    %v1274 = vpack.c.b16 %v1210, %v1208
    %v1275 = vpack.c.b16 %v1211, %v1209
    %1340 = vmatpush.bf16.msra.mxu0 %v1226
    %1341 = vmatpush.bf16.msra.mxu0 %v1224
    %1342 = vmatpush.bf16.msra.mxu0 %v1222
    %1343 = vmatpush.bf16.msra.mxu0 %v1220
    %1344 = vmatpush.bf16.msra.mxu0 %v1218
    %1345 = vmatpush.bf16.msra.mxu0 %v1216
    %1346 = vmatpush.bf16.msra.mxu0 %v1214
    %1347 = vmatpush.bf16.msra.mxu0 %v1212
    %1348 = vmatmul.bf16.gmra.mxu0 %v924
    %v1349 = vpop.f32.mrf.mxu0
    %v1350 = vadd.f32 0.0, %v1349
    %v1351 = vpop.f32.mrf.mxu0
    %v1352 = vadd.f32 0.0, %v1351
    %1353 = vmatmul.bf16.gmra.mxu0 %v928
    %v1354 = vpop.f32.mrf.mxu0
    %v1355 = vadd.f32 0.0, %v1354
    %v1356 = vpop.f32.mrf.mxu0
    %v1357 = vadd.f32 0.0, %v1356
    %1358 = vmatmul.bf16.gmra.mxu0 %v932
    %v1359 = vpop.f32.mrf.mxu0
    %v1360 = vadd.f32 0.0, %v1359
    %v1361 = vpop.f32.mrf.mxu0
    %v1362 = vadd.f32 0.0, %v1361
    %1363 = vmatmul.bf16.gmra.mxu0 %v936
    %v1364 = vpop.f32.mrf.mxu0
    %v1365 = vadd.f32 0.0, %v1364
    %v1366 = vpop.f32.mrf.mxu0
    %v1367 = vadd.f32 0.0, %v1366
    %1368 = vmatmul.bf16.gmra.mxu0 %v940
    %v1369 = vpop.f32.mrf.mxu0
    %v1370 = vadd.f32 0.0, %v1369
    %v1371 = vpop.f32.mrf.mxu0
    %v1372 = vadd.f32 0.0, %v1371
    %1373 = vmatmul.bf16.gmra.mxu0 %v944
    %v1374 = vpop.f32.mrf.mxu0
    %v1375 = vadd.f32 0.0, %v1374
    %v1376 = vpop.f32.mrf.mxu0
    %v1377 = vadd.f32 0.0, %v1376
    %1378 = vmatmul.bf16.gmra.mxu0 %v948
    %v1379 = vpop.f32.mrf.mxu0
    %v1380 = vadd.f32 0.0, %v1379
    %v1381 = vpop.f32.mrf.mxu0
    %v1382 = vadd.f32 0.0, %v1381
    %1383 = vmatmul.bf16.gmra.mxu0 %v952
    %v1384 = vpop.f32.mrf.mxu0
    %v1385 = vadd.f32 0.0, %v1384
    %v1386 = vpop.f32.mrf.mxu0
    %v1387 = vadd.f32 0.0, %v1386
    %1388 = vdwg.mxu0
    %1389 = vmatpush.bf16.msra.mxu0 %v1242
    %1390 = vmatpush.bf16.msra.mxu0 %v1240
    %1391 = vmatpush.bf16.msra.mxu0 %v1238
    %1392 = vmatpush.bf16.msra.mxu0 %v1236
    %1393 = vmatpush.bf16.msra.mxu0 %v1234
    %1394 = vmatpush.bf16.msra.mxu0 %v1232
    %1395 = vmatpush.bf16.msra.mxu0 %v1230
    %1396 = vmatpush.bf16.msra.mxu0 %v1228
    %1397 = vmatmul.bf16.gmra.mxu0 %v925
    %v1398 = vpop.f32.mrf.mxu0
    %v1399 = vadd.f32 %v1350, %v1398
    %v1400 = vpop.f32.mrf.mxu0
    %v1401 = vadd.f32 %v1352, %v1400
    %1402 = vmatmul.bf16.gmra.mxu0 %v929
    %v1403 = vpop.f32.mrf.mxu0
    %v1404 = vadd.f32 %v1355, %v1403
    %v1405 = vpop.f32.mrf.mxu0
    %v1406 = vadd.f32 %v1357, %v1405
    %1407 = vmatmul.bf16.gmra.mxu0 %v933
    %v1408 = vpop.f32.mrf.mxu0
    %v1409 = vadd.f32 %v1360, %v1408
    %v1410 = vpop.f32.mrf.mxu0
    %v1411 = vadd.f32 %v1362, %v1410
    %1412 = vmatmul.bf16.gmra.mxu0 %v937
    %v1413 = vpop.f32.mrf.mxu0
    %v1414 = vadd.f32 %v1365, %v1413
    %v1415 = vpop.f32.mrf.mxu0
    %v1416 = vadd.f32 %v1367, %v1415
    %1417 = vmatmul.bf16.gmra.mxu0 %v941
    %v1418 = vpop.f32.mrf.mxu0
    %v1419 = vadd.f32 %v1370, %v1418
    %v1420 = vpop.f32.mrf.mxu0
    %v1421 = vadd.f32 %v1372, %v1420
    %1422 = vmatmul.bf16.gmra.mxu0 %v945
    %v1423 = vpop.f32.mrf.mxu0
    %v1424 = vadd.f32 %v1375, %v1423
    %v1425 = vpop.f32.mrf.mxu0
    %v1426 = vadd.f32 %v1377, %v1425
    %1427 = vmatmul.bf16.gmra.mxu0 %v949
    %v1428 = vpop.f32.mrf.mxu0
    %v1429 = vadd.f32 %v1380, %v1428
    %v1430 = vpop.f32.mrf.mxu0
    %v1431 = vadd.f32 %v1382, %v1430
    %1432 = vmatmul.bf16.gmra.mxu0 %v953
    %v1433 = vpop.f32.mrf.mxu0
    %v1434 = vadd.f32 %v1385, %v1433
    %v1435 = vpop.f32.mrf.mxu0
    %v1436 = vadd.f32 %v1387, %v1435
    %1437 = vdwg.mxu0
    %1438 = vmatpush.bf16.msra.mxu0 %v1258
    %1439 = vmatpush.bf16.msra.mxu0 %v1256
    %1440 = vmatpush.bf16.msra.mxu0 %v1254
    %1441 = vmatpush.bf16.msra.mxu0 %v1252
    %1442 = vmatpush.bf16.msra.mxu0 %v1250
    %1443 = vmatpush.bf16.msra.mxu0 %v1248
    %1444 = vmatpush.bf16.msra.mxu0 %v1246
    %1445 = vmatpush.bf16.msra.mxu0 %v1244
    %1446 = vmatmul.bf16.gmra.mxu0 %v926
    %v1447 = vpop.f32.mrf.mxu0
    %v1448 = vadd.f32 %v1399, %v1447
    %v1449 = vpop.f32.mrf.mxu0
    %v1450 = vadd.f32 %v1401, %v1449
    %1451 = vmatmul.bf16.gmra.mxu0 %v930
    %v1452 = vpop.f32.mrf.mxu0
    %v1453 = vadd.f32 %v1404, %v1452
    %v1454 = vpop.f32.mrf.mxu0
    %v1455 = vadd.f32 %v1406, %v1454
    %1456 = vmatmul.bf16.gmra.mxu0 %v934
    %v1457 = vpop.f32.mrf.mxu0
    %v1458 = vadd.f32 %v1409, %v1457
    %v1459 = vpop.f32.mrf.mxu0
    %v1460 = vadd.f32 %v1411, %v1459
    %1461 = vmatmul.bf16.gmra.mxu0 %v938
    %v1462 = vpop.f32.mrf.mxu0
    %v1463 = vadd.f32 %v1414, %v1462
    %v1464 = vpop.f32.mrf.mxu0
    %v1465 = vadd.f32 %v1416, %v1464
    %1466 = vmatmul.bf16.gmra.mxu0 %v942
    %v1467 = vpop.f32.mrf.mxu0
    %v1468 = vadd.f32 %v1419, %v1467
    %v1469 = vpop.f32.mrf.mxu0
    %v1470 = vadd.f32 %v1421, %v1469
    %1471 = vmatmul.bf16.gmra.mxu0 %v946
    %v1472 = vpop.f32.mrf.mxu0
    %v1473 = vadd.f32 %v1424, %v1472
    %v1474 = vpop.f32.mrf.mxu0
    %v1475 = vadd.f32 %v1426, %v1474
    %1476 = vmatmul.bf16.gmra.mxu0 %v950
    %v1477 = vpop.f32.mrf.mxu0
    %v1478 = vadd.f32 %v1429, %v1477
    %v1479 = vpop.f32.mrf.mxu0
    %v1480 = vadd.f32 %v1431, %v1479
    %1481 = vmatmul.bf16.gmra.mxu0 %v954
    %v1482 = vpop.f32.mrf.mxu0
    %v1483 = vadd.f32 %v1434, %v1482
    %v1484 = vpop.f32.mrf.mxu0
    %v1485 = vadd.f32 %v1436, %v1484
    %1486 = vdwg.mxu0
    %1487 = vmatpush.bf16.msra.mxu0 %v1274
    %1488 = vmatpush.bf16.msra.mxu0 %v1272
    %1489 = vmatpush.bf16.msra.mxu0 %v1270
    %1490 = vmatpush.bf16.msra.mxu0 %v1268
    %1491 = vmatpush.bf16.msra.mxu0 %v1266
    %1492 = vmatpush.bf16.msra.mxu0 %v1264
    %1493 = vmatpush.bf16.msra.mxu0 %v1262
    %1494 = vmatpush.bf16.msra.mxu0 %v1260
    %1495 = vmatmul.bf16.gmra.mxu0 %v927
    %v1496 = vpop.f32.mrf.mxu0
    %v1497 = vadd.f32 %v1448, %v1496
    %v1498 = vpop.f32.mrf.mxu0
    %v1499 = vadd.f32 %v1450, %v1498
    %1500 = vmatmul.bf16.gmra.mxu0 %v931
    %v1501 = vpop.f32.mrf.mxu0
    %v1502 = vadd.f32 %v1453, %v1501
    %v1503 = vpop.f32.mrf.mxu0
    %v1504 = vadd.f32 %v1455, %v1503
    %1505 = vmatmul.bf16.gmra.mxu0 %v935
    %v1506 = vpop.f32.mrf.mxu0
    %v1507 = vadd.f32 %v1458, %v1506
    %v1508 = vpop.f32.mrf.mxu0
    %v1509 = vadd.f32 %v1460, %v1508
    %1510 = vmatmul.bf16.gmra.mxu0 %v939
    %v1511 = vpop.f32.mrf.mxu0
    %v1512 = vadd.f32 %v1463, %v1511
    %v1513 = vpop.f32.mrf.mxu0
    %v1514 = vadd.f32 %v1465, %v1513
    %1515 = vmatmul.bf16.gmra.mxu0 %v943
    %v1516 = vpop.f32.mrf.mxu0
    %v1517 = vadd.f32 %v1468, %v1516
    %v1518 = vpop.f32.mrf.mxu0
    %v1519 = vadd.f32 %v1470, %v1518
    %1520 = vmatmul.bf16.gmra.mxu0 %v947
    %v1521 = vpop.f32.mrf.mxu0
    %v1522 = vadd.f32 %v1473, %v1521
    %v1523 = vpop.f32.mrf.mxu0
    %v1524 = vadd.f32 %v1475, %v1523
    %1525 = vmatmul.bf16.gmra.mxu0 %v951
    %v1526 = vpop.f32.mrf.mxu0
    %v1527 = vadd.f32 %v1478, %v1526
    %v1528 = vpop.f32.mrf.mxu0
    %v1529 = vadd.f32 %v1480, %v1528
    %1530 = vmatmul.bf16.gmra.mxu0 %v955
    %v1531 = vpop.f32.mrf.mxu0
    %v1532 = vadd.f32 %v1483, %v1531
    %v1533 = vpop.f32.mrf.mxu0
    %v1534 = vadd.f32 %v1485, %v1533
    %1535 = vdwg.mxu0
    %1536 = vmatpush.bf16.msra.mxu0 %v1227
    %1537 = vmatpush.bf16.msra.mxu0 %v1225
    %1538 = vmatpush.bf16.msra.mxu0 %v1223
    %1539 = vmatpush.bf16.msra.mxu0 %v1221
    %1540 = vmatpush.bf16.msra.mxu0 %v1219
    %1541 = vmatpush.bf16.msra.mxu0 %v1217
    %1542 = vmatpush.bf16.msra.mxu0 %v1215
    %1543 = vmatpush.bf16.msra.mxu0 %v1213
    %1544 = vmatmul.bf16.gmra.mxu0 %v924
    %v1545 = vpop.f32.mrf.mxu0
    %v1546 = vadd.f32 0.0, %v1545
    %v1547 = vpop.f32.mrf.mxu0
    %v1548 = vadd.f32 0.0, %v1547
    %1549 = vmatmul.bf16.gmra.mxu0 %v928
    %v1550 = vpop.f32.mrf.mxu0
    %v1551 = vadd.f32 0.0, %v1550
    %v1552 = vpop.f32.mrf.mxu0
    %v1553 = vadd.f32 0.0, %v1552
    %1554 = vmatmul.bf16.gmra.mxu0 %v932
    %v1555 = vpop.f32.mrf.mxu0
    %v1556 = vadd.f32 0.0, %v1555
    %v1557 = vpop.f32.mrf.mxu0
    %v1558 = vadd.f32 0.0, %v1557
    %1559 = vmatmul.bf16.gmra.mxu0 %v936
    %v1560 = vpop.f32.mrf.mxu0
    %v1561 = vadd.f32 0.0, %v1560
    %v1562 = vpop.f32.mrf.mxu0
    %v1563 = vadd.f32 0.0, %v1562
    %1564 = vmatmul.bf16.gmra.mxu0 %v940
    %v1565 = vpop.f32.mrf.mxu0
    %v1566 = vadd.f32 0.0, %v1565
    %v1567 = vpop.f32.mrf.mxu0
    %v1568 = vadd.f32 0.0, %v1567
    %1569 = vmatmul.bf16.gmra.mxu0 %v944
    %v1570 = vpop.f32.mrf.mxu0
    %v1571 = vadd.f32 0.0, %v1570
    %v1572 = vpop.f32.mrf.mxu0
    %v1573 = vadd.f32 0.0, %v1572
    %1574 = vmatmul.bf16.gmra.mxu0 %v948
    %v1575 = vpop.f32.mrf.mxu0
    %v1576 = vadd.f32 0.0, %v1575
    %v1577 = vpop.f32.mrf.mxu0
    %v1578 = vadd.f32 0.0, %v1577
    %1579 = vmatmul.bf16.gmra.mxu0 %v952
    %v1580 = vpop.f32.mrf.mxu0
    %v1581 = vadd.f32 0.0, %v1580
    %v1582 = vpop.f32.mrf.mxu0
    %v1583 = vadd.f32 0.0, %v1582
    %1584 = vdwg.mxu0
    %1585 = vmatpush.bf16.msra.mxu0 %v1243
    %1586 = vmatpush.bf16.msra.mxu0 %v1241
    %1587 = vmatpush.bf16.msra.mxu0 %v1239
    %1588 = vmatpush.bf16.msra.mxu0 %v1237
    %1589 = vmatpush.bf16.msra.mxu0 %v1235
    %1590 = vmatpush.bf16.msra.mxu0 %v1233
    %1591 = vmatpush.bf16.msra.mxu0 %v1231
    %1592 = vmatpush.bf16.msra.mxu0 %v1229
    %1593 = vmatmul.bf16.gmra.mxu0 %v925
    %v1594 = vpop.f32.mrf.mxu0
    %v1595 = vadd.f32 %v1546, %v1594
    %v1596 = vpop.f32.mrf.mxu0
    %v1597 = vadd.f32 %v1548, %v1596
    %1598 = vmatmul.bf16.gmra.mxu0 %v929
    %v1599 = vpop.f32.mrf.mxu0
    %v1600 = vadd.f32 %v1551, %v1599
    %v1601 = vpop.f32.mrf.mxu0
    %v1602 = vadd.f32 %v1553, %v1601
    %1603 = vmatmul.bf16.gmra.mxu0 %v933
    %v1604 = vpop.f32.mrf.mxu0
    %v1605 = vadd.f32 %v1556, %v1604
    %v1606 = vpop.f32.mrf.mxu0
    %v1607 = vadd.f32 %v1558, %v1606
    %1608 = vmatmul.bf16.gmra.mxu0 %v937
    %v1609 = vpop.f32.mrf.mxu0
    %v1610 = vadd.f32 %v1561, %v1609
    %v1611 = vpop.f32.mrf.mxu0
    %v1612 = vadd.f32 %v1563, %v1611
    %1613 = vmatmul.bf16.gmra.mxu0 %v941
    %v1614 = vpop.f32.mrf.mxu0
    %v1615 = vadd.f32 %v1566, %v1614
    %v1616 = vpop.f32.mrf.mxu0
    %v1617 = vadd.f32 %v1568, %v1616
    %1618 = vmatmul.bf16.gmra.mxu0 %v945
    %v1619 = vpop.f32.mrf.mxu0
    %v1620 = vadd.f32 %v1571, %v1619
    %v1621 = vpop.f32.mrf.mxu0
    %v1622 = vadd.f32 %v1573, %v1621
    %1623 = vmatmul.bf16.gmra.mxu0 %v949
    %v1624 = vpop.f32.mrf.mxu0
    %v1625 = vadd.f32 %v1576, %v1624
    %v1626 = vpop.f32.mrf.mxu0
    %v1627 = vadd.f32 %v1578, %v1626
    %1628 = vmatmul.bf16.gmra.mxu0 %v953
    %v1629 = vpop.f32.mrf.mxu0
    %v1630 = vadd.f32 %v1581, %v1629
    %v1631 = vpop.f32.mrf.mxu0
    %v1632 = vadd.f32 %v1583, %v1631
    %1633 = vdwg.mxu0
    %1634 = vmatpush.bf16.msra.mxu0 %v1259
    %1635 = vmatpush.bf16.msra.mxu0 %v1257
    %1636 = vmatpush.bf16.msra.mxu0 %v1255
    %1637 = vmatpush.bf16.msra.mxu0 %v1253
    %1638 = vmatpush.bf16.msra.mxu0 %v1251
    %1639 = vmatpush.bf16.msra.mxu0 %v1249
    %1640 = vmatpush.bf16.msra.mxu0 %v1247
    %1641 = vmatpush.bf16.msra.mxu0 %v1245
    %1642 = vmatmul.bf16.gmra.mxu0 %v926
    %v1643 = vpop.f32.mrf.mxu0
    %v1644 = vadd.f32 %v1595, %v1643
    %v1645 = vpop.f32.mrf.mxu0
    %v1646 = vadd.f32 %v1597, %v1645
    %1647 = vmatmul.bf16.gmra.mxu0 %v930
    %v1648 = vpop.f32.mrf.mxu0
    %v1649 = vadd.f32 %v1600, %v1648
    %v1650 = vpop.f32.mrf.mxu0
    %v1651 = vadd.f32 %v1602, %v1650
    %1652 = vmatmul.bf16.gmra.mxu0 %v934
    %v1653 = vpop.f32.mrf.mxu0
    %v1654 = vadd.f32 %v1605, %v1653
    %v1655 = vpop.f32.mrf.mxu0
    %v1656 = vadd.f32 %v1607, %v1655
    %1657 = vmatmul.bf16.gmra.mxu0 %v938
    %v1658 = vpop.f32.mrf.mxu0
    %v1659 = vadd.f32 %v1610, %v1658
    %v1660 = vpop.f32.mrf.mxu0
    %v1661 = vadd.f32 %v1612, %v1660
    %1662 = vmatmul.bf16.gmra.mxu0 %v942
    %v1663 = vpop.f32.mrf.mxu0
    %v1664 = vadd.f32 %v1615, %v1663
    %v1665 = vpop.f32.mrf.mxu0
    %v1666 = vadd.f32 %v1617, %v1665
    %1667 = vmatmul.bf16.gmra.mxu0 %v946
    %v1668 = vpop.f32.mrf.mxu0
    %v1669 = vadd.f32 %v1620, %v1668
    %v1670 = vpop.f32.mrf.mxu0
    %v1671 = vadd.f32 %v1622, %v1670
    %1672 = vmatmul.bf16.gmra.mxu0 %v950
    %v1673 = vpop.f32.mrf.mxu0
    %v1674 = vadd.f32 %v1625, %v1673
    %v1675 = vpop.f32.mrf.mxu0
    %v1676 = vadd.f32 %v1627, %v1675
    %1677 = vmatmul.bf16.gmra.mxu0 %v954
    %v1678 = vpop.f32.mrf.mxu0
    %v1679 = vadd.f32 %v1630, %v1678
    %v1680 = vpop.f32.mrf.mxu0
    %v1681 = vadd.f32 %v1632, %v1680
    %1682 = vdwg.mxu0
    %1683 = vmatpush.bf16.msra.mxu0 %v1275
    %1684 = vmatpush.bf16.msra.mxu0 %v1273
    %1685 = vmatpush.bf16.msra.mxu0 %v1271
    %1686 = vmatpush.bf16.msra.mxu0 %v1269
    %1687 = vmatpush.bf16.msra.mxu0 %v1267
    %1688 = vmatpush.bf16.msra.mxu0 %v1265
    %1689 = vmatpush.bf16.msra.mxu0 %v1263
    %1690 = vmatpush.bf16.msra.mxu0 %v1261
    %1691 = vmatmul.bf16.gmra.mxu0 %v927
    %v1692 = vpop.f32.mrf.mxu0
    %v1693 = vadd.f32 %v1644, %v1692
    %v1694 = vpop.f32.mrf.mxu0
    %v1695 = vadd.f32 %v1646, %v1694
    %1696 = vmatmul.bf16.gmra.mxu0 %v931
    %v1697 = vpop.f32.mrf.mxu0
    %v1698 = vadd.f32 %v1649, %v1697
    %v1699 = vpop.f32.mrf.mxu0
    %v1700 = vadd.f32 %v1651, %v1699
    %1701 = vmatmul.bf16.gmra.mxu0 %v935
    %v1702 = vpop.f32.mrf.mxu0
    %v1703 = vadd.f32 %v1654, %v1702
    %v1704 = vpop.f32.mrf.mxu0
    %v1705 = vadd.f32 %v1656, %v1704
    %1706 = vmatmul.bf16.gmra.mxu0 %v939
    %v1707 = vpop.f32.mrf.mxu0
    %v1708 = vadd.f32 %v1659, %v1707
    %v1709 = vpop.f32.mrf.mxu0
    %v1710 = vadd.f32 %v1661, %v1709
    %1711 = vmatmul.bf16.gmra.mxu0 %v943
    %v1712 = vpop.f32.mrf.mxu0
    %v1713 = vadd.f32 %v1664, %v1712
    %v1714 = vpop.f32.mrf.mxu0
    %v1715 = vadd.f32 %v1666, %v1714
    %1716 = vmatmul.bf16.gmra.mxu0 %v947
    %v1717 = vpop.f32.mrf.mxu0
    %v1718 = vadd.f32 %v1669, %v1717
    %v1719 = vpop.f32.mrf.mxu0
    %v1720 = vadd.f32 %v1671, %v1719
    %1721 = vmatmul.bf16.gmra.mxu0 %v951
    %v1722 = vpop.f32.mrf.mxu0
    %v1723 = vadd.f32 %v1674, %v1722
    %v1724 = vpop.f32.mrf.mxu0
    %v1725 = vadd.f32 %v1676, %v1724
    %1726 = vmatmul.bf16.gmra.mxu0 %v955
    %v1727 = vpop.f32.mrf.mxu0
    %v1728 = vadd.f32 %v1679, %v1727
    %v1729 = vpop.f32.mrf.mxu0
    %v1730 = vadd.f32 %v1681, %v1729
    %1731 = vdwg.mxu0
    %s1732 = scalar_lea.vmem %s6, 2
    %v1733 = vld [vmem:[%s1732] ss:$8 sm:$0x3]
    %s1734 = scalar_lea.vmem %s6, 3
    %v1735 = vld [vmem:[%s1734] ss:$8 sm:$0x3]
    %1736 = vmatpush.msra.mxu0 %v1534
    %1737 = vmatpush.msra.mxu0 %v1532
    %1738 = vmatpush.msra.mxu0 %v1529
    %1739 = vmatpush.msra.mxu0 %v1527
    %1740 = vmatpush.msra.mxu0 %v1524
    %1741 = vmatpush.msra.mxu0 %v1522
    %1742 = vmatpush.msra.mxu0 %v1519
    %1743 = vmatpush.msra.mxu0 %v1517
    %1744 = vmatpush.msra.mxu0 %v1514
    %1745 = vmatpush.msra.mxu0 %v1512
    %1746 = vmatpush.msra.mxu0 %v1509
    %1747 = vmatpush.msra.mxu0 %v1507
    %1748 = vmatpush.msra.mxu0 %v1504
    %1749 = vmatpush.msra.mxu0 %v1502
    %1750 = vmatpush.msra.mxu0 %v1499
    %1751 = vmatpush.msra.mxu0 %v1497
    %1752 = vmatmul.f32.gmra.mxu0 1.0
    %v1753 = vpop.f32.mrf.mxu0
    %v1754 = vadd.f32 0.0, %v1753
    %1755 = vdwg.mxu0
    %1756 = vmatpush.msra.mxu0 %v1730
    %1757 = vmatpush.msra.mxu0 %v1728
    %1758 = vmatpush.msra.mxu0 %v1725
    %1759 = vmatpush.msra.mxu0 %v1723
    %1760 = vmatpush.msra.mxu0 %v1720
    %1761 = vmatpush.msra.mxu0 %v1718
    %1762 = vmatpush.msra.mxu0 %v1715
    %1763 = vmatpush.msra.mxu0 %v1713
    %1764 = vmatpush.msra.mxu0 %v1710
    %1765 = vmatpush.msra.mxu0 %v1708
    %1766 = vmatpush.msra.mxu0 %v1705
    %1767 = vmatpush.msra.mxu0 %v1703
    %1768 = vmatpush.msra.mxu0 %v1700
    %1769 = vmatpush.msra.mxu0 %v1698
    %1770 = vmatpush.msra.mxu0 %v1695
    %1771 = vmatpush.msra.mxu0 %v1693
    %1772 = vmatmul.f32.gmra.mxu0 1.0
    %v1773 = vpop.f32.mrf.mxu0
    %v1774 = vadd.f32 0.0, %v1773
    %1775 = vdwg.mxu0
    %v1776 = vmul.f32 %v1754, 0.0078125
    %v1777 = vmul.f32 %v1774, 0.0078125
    %v1778 = vperm.slane %v1776, 0
    %v1779 = vperm.slane %v1777, 0
    %v1780 = vsub.f32 %v1497, %v1778
    %v1781 = vsub.f32 %v1693, %v1779
    %v1782 = vsub.f32 %v1499, %v1778
    %v1783 = vsub.f32 %v1695, %v1779
    %v1784 = vsub.f32 %v1502, %v1778
    %v1785 = vsub.f32 %v1698, %v1779
    %v1786 = vsub.f32 %v1504, %v1778
    %v1787 = vsub.f32 %v1700, %v1779
    %v1788 = vsub.f32 %v1507, %v1778
    %v1789 = vsub.f32 %v1703, %v1779
    %v1790 = vsub.f32 %v1509, %v1778
    %v1791 = vsub.f32 %v1705, %v1779
    %v1792 = vsub.f32 %v1512, %v1778
    %v1793 = vsub.f32 %v1708, %v1779
    %v1794 = vsub.f32 %v1514, %v1778
    %v1795 = vsub.f32 %v1710, %v1779
    %v1796 = vsub.f32 %v1517, %v1778
    %v1797 = vsub.f32 %v1713, %v1779
    %v1798 = vsub.f32 %v1519, %v1778
    %v1799 = vsub.f32 %v1715, %v1779
    %v1800 = vsub.f32 %v1522, %v1778
    %v1801 = vsub.f32 %v1718, %v1779
    %v1802 = vsub.f32 %v1524, %v1778
    %v1803 = vsub.f32 %v1720, %v1779
    %v1804 = vsub.f32 %v1527, %v1778
    %v1805 = vsub.f32 %v1723, %v1779
    %v1806 = vsub.f32 %v1529, %v1778
    %v1807 = vsub.f32 %v1725, %v1779
    %v1808 = vsub.f32 %v1532, %v1778
    %v1809 = vsub.f32 %v1728, %v1779
    %v1810 = vsub.f32 %v1534, %v1778
    %v1811 = vsub.f32 %v1730, %v1779
    %v1812 = vmul.f32 %v1780, %v1780
    %v1813 = vmul.f32 %v1781, %v1781
    %v1814 = vmul.f32 %v1782, %v1782
    %v1815 = vmul.f32 %v1783, %v1783
    %v1816 = vmul.f32 %v1784, %v1784
    %v1817 = vmul.f32 %v1785, %v1785
    %v1818 = vmul.f32 %v1786, %v1786
    %v1819 = vmul.f32 %v1787, %v1787
    %v1820 = vmul.f32 %v1788, %v1788
    %v1821 = vmul.f32 %v1789, %v1789
    %v1822 = vmul.f32 %v1790, %v1790
    %v1823 = vmul.f32 %v1791, %v1791
    %v1824 = vmul.f32 %v1792, %v1792
    %v1825 = vmul.f32 %v1793, %v1793
    %v1826 = vmul.f32 %v1794, %v1794
    %v1827 = vmul.f32 %v1795, %v1795
    %v1828 = vmul.f32 %v1796, %v1796
    %v1829 = vmul.f32 %v1797, %v1797
    %v1830 = vmul.f32 %v1798, %v1798
    %v1831 = vmul.f32 %v1799, %v1799
    %v1832 = vmul.f32 %v1800, %v1800
    %v1833 = vmul.f32 %v1801, %v1801
    %v1834 = vmul.f32 %v1802, %v1802
    %v1835 = vmul.f32 %v1803, %v1803
    %v1836 = vmul.f32 %v1804, %v1804
    %v1837 = vmul.f32 %v1805, %v1805
    %v1838 = vmul.f32 %v1806, %v1806
    %v1839 = vmul.f32 %v1807, %v1807
    %v1840 = vmul.f32 %v1808, %v1808
    %v1841 = vmul.f32 %v1809, %v1809
    %v1842 = vmul.f32 %v1810, %v1810
    %v1843 = vmul.f32 %v1811, %v1811
    %1844 = vmatpush.msra.mxu0 %v1842
    %1845 = vmatpush.msra.mxu0 %v1840
    %1846 = vmatpush.msra.mxu0 %v1838
    %1847 = vmatpush.msra.mxu0 %v1836
    %1848 = vmatpush.msra.mxu0 %v1834
    %1849 = vmatpush.msra.mxu0 %v1832
    %1850 = vmatpush.msra.mxu0 %v1830
    %1851 = vmatpush.msra.mxu0 %v1828
    %1852 = vmatpush.msra.mxu0 %v1826
    %1853 = vmatpush.msra.mxu0 %v1824
    %1854 = vmatpush.msra.mxu0 %v1822
    %1855 = vmatpush.msra.mxu0 %v1820
    %1856 = vmatpush.msra.mxu0 %v1818
    %1857 = vmatpush.msra.mxu0 %v1816
    %1858 = vmatpush.msra.mxu0 %v1814
    %1859 = vmatpush.msra.mxu0 %v1812
    %1860 = vmatmul.f32.gmra.mxu0 1.0
    %v1861 = vpop.f32.mrf.mxu0
    %v1862 = vadd.f32 0.0, %v1861
    %1863 = vdwg.mxu0
    %1864 = vmatpush.msra.mxu0 %v1843
    %1865 = vmatpush.msra.mxu0 %v1841
    %1866 = vmatpush.msra.mxu0 %v1839
    %1867 = vmatpush.msra.mxu0 %v1837
    %1868 = vmatpush.msra.mxu0 %v1835
    %1869 = vmatpush.msra.mxu0 %v1833
    %1870 = vmatpush.msra.mxu0 %v1831
    %1871 = vmatpush.msra.mxu0 %v1829
    %1872 = vmatpush.msra.mxu0 %v1827
    %1873 = vmatpush.msra.mxu0 %v1825
    %1874 = vmatpush.msra.mxu0 %v1823
    %1875 = vmatpush.msra.mxu0 %v1821
    %1876 = vmatpush.msra.mxu0 %v1819
    %1877 = vmatpush.msra.mxu0 %v1817
    %1878 = vmatpush.msra.mxu0 %v1815
    %1879 = vmatpush.msra.mxu0 %v1813
    %1880 = vmatmul.f32.gmra.mxu0 1.0
    %v1881 = vpop.f32.mrf.mxu0
    %v1882 = vadd.f32 0.0, %v1881
    %1883 = vdwg.mxu0
    %v1884 = vmul.f32 %v1862, 0.0078125
    %v1885 = vmul.f32 %v1882, 0.0078125
    %v1886 = vadd.f32 %v1884, 1e-05
    %v1887 = vadd.f32 %v1885, 1e-05
    %v1888 = vrsqrt.pop %v1886
    %v1889 = vmul.f32 %v1888, %v1886
    %v1890 = vmul.f32 %v1889, %v1888
    %v1891 = vmul.f32 0.5, %v1890
    %v1892 = vsub.f32 1.5, %v1891
    %v1893 = vmul.f32 %v1888, %v1892
    %vm1894 = vweird.f32 %v1886
    %vm1895 = vweird.f32 %v1888
    %vm1896 = vmor %vm1894, %vm1895
    %v1897 = vsel %vm1896, %v1888, %v1893
    %v1898 = vrsqrt.pop %v1887
    %v1899 = vmul.f32 %v1898, %v1887
    %v1900 = vmul.f32 %v1899, %v1898
    %v1901 = vmul.f32 0.5, %v1900
    %v1902 = vsub.f32 1.5, %v1901
    %v1903 = vmul.f32 %v1898, %v1902
    %vm1904 = vweird.f32 %v1887
    %vm1905 = vweird.f32 %v1898
    %vm1906 = vmor %vm1904, %vm1905
    %v1907 = vsel %vm1906, %v1898, %v1903
    %v1910 = vrot.slane %v1907, 7
    %v1911 = vsel %vm706, %v1897, %v1910
    %v1913 = vmul.f32 %v1733, %v1911
    %v1915 = vperm.slane %v1913, 0
    %v1916 = vperm.slane %v1913, 1
    %v1919 = vmul.f32 %v1780, %v1915
    %v1920 = vmul.f32 %v1781, %v1916
    %v1921 = vmul.f32 %v1782, %v1915
    %v1922 = vmul.f32 %v1783, %v1916
    %v1923 = vmul.f32 %v1784, %v1915
    %v1924 = vmul.f32 %v1785, %v1916
    %v1925 = vmul.f32 %v1786, %v1915
    %v1926 = vmul.f32 %v1787, %v1916
    %v1927 = vmul.f32 %v1788, %v1915
    %v1928 = vmul.f32 %v1789, %v1916
    %v1929 = vmul.f32 %v1790, %v1915
    %v1930 = vmul.f32 %v1791, %v1916
    %v1931 = vmul.f32 %v1792, %v1915
    %v1932 = vmul.f32 %v1793, %v1916
    %v1933 = vmul.f32 %v1794, %v1915
    %v1934 = vmul.f32 %v1795, %v1916
    %v1935 = vmul.f32 %v1796, %v1915
    %v1936 = vmul.f32 %v1797, %v1916
    %v1937 = vmul.f32 %v1798, %v1915
    %v1938 = vmul.f32 %v1799, %v1916
    %v1939 = vmul.f32 %v1800, %v1915
    %v1940 = vmul.f32 %v1801, %v1916
    %v1941 = vmul.f32 %v1802, %v1915
    %v1942 = vmul.f32 %v1803, %v1916
    %v1943 = vmul.f32 %v1804, %v1915
    %v1944 = vmul.f32 %v1805, %v1916
    %v1945 = vmul.f32 %v1806, %v1915
    %v1946 = vmul.f32 %v1807, %v1916
    %v1947 = vmul.f32 %v1808, %v1915
    %v1948 = vmul.f32 %v1809, %v1916
    %v1949 = vmul.f32 %v1810, %v1915
    %v1950 = vmul.f32 %v1811, %v1916
    %v1952 = vperm.slane %v1735, 0
    %v1953 = vperm.slane %v1735, 1
    %v1956 = vadd.f32 %v1919, %v1952
    %v1957 = vadd.f32 %v1920, %v1953
    %v1958 = vadd.f32 %v1921, %v1952
    %v1959 = vadd.f32 %v1922, %v1953
    %v1960 = vadd.f32 %v1923, %v1952
    %v1961 = vadd.f32 %v1924, %v1953
    %v1962 = vadd.f32 %v1925, %v1952
    %v1963 = vadd.f32 %v1926, %v1953
    %v1964 = vadd.f32 %v1927, %v1952
    %v1965 = vadd.f32 %v1928, %v1953
    %v1966 = vadd.f32 %v1929, %v1952
    %v1967 = vadd.f32 %v1930, %v1953
    %v1968 = vadd.f32 %v1931, %v1952
    %v1969 = vadd.f32 %v1932, %v1953
    %v1970 = vadd.f32 %v1933, %v1952
    %v1971 = vadd.f32 %v1934, %v1953
    %v1972 = vadd.f32 %v1935, %v1952
    %v1973 = vadd.f32 %v1936, %v1953
    %v1974 = vadd.f32 %v1937, %v1952
    %v1975 = vadd.f32 %v1938, %v1953
    %v1976 = vadd.f32 %v1939, %v1952
    %v1977 = vadd.f32 %v1940, %v1953
    %v1978 = vadd.f32 %v1941, %v1952
    %v1979 = vadd.f32 %v1942, %v1953
    %v1980 = vadd.f32 %v1943, %v1952
    %v1981 = vadd.f32 %v1944, %v1953
    %v1982 = vadd.f32 %v1945, %v1952
    %v1983 = vadd.f32 %v1946, %v1953
    %v1984 = vadd.f32 %v1947, %v1952
    %v1985 = vadd.f32 %v1948, %v1953
    %v1986 = vadd.f32 %v1949, %v1952
    %v1987 = vadd.f32 %v1950, %v1953
    %v1988 = vmax.f32 %v1956, 0.0
    %v1989 = vmax.f32 %v1957, 0.0
    %v1990 = vmax.f32 %v1958, 0.0
    %v1991 = vmax.f32 %v1959, 0.0
    %v1992 = vmax.f32 %v1960, 0.0
    %v1993 = vmax.f32 %v1961, 0.0
    %v1994 = vmax.f32 %v1962, 0.0
    %v1995 = vmax.f32 %v1963, 0.0
    %v1996 = vmax.f32 %v1964, 0.0
    %v1997 = vmax.f32 %v1965, 0.0
    %v1998 = vmax.f32 %v1966, 0.0
    %v1999 = vmax.f32 %v1967, 0.0
    %v2000 = vmax.f32 %v1968, 0.0
    %v2001 = vmax.f32 %v1969, 0.0
    %v2002 = vmax.f32 %v1970, 0.0
    %v2003 = vmax.f32 %v1971, 0.0
    %v2004 = vmax.f32 %v1972, 0.0
    %v2005 = vmax.f32 %v1973, 0.0
    %v2006 = vmax.f32 %v1974, 0.0
    %v2007 = vmax.f32 %v1975, 0.0
    %v2008 = vmax.f32 %v1976, 0.0
    %v2009 = vmax.f32 %v1977, 0.0
    %v2010 = vmax.f32 %v1978, 0.0
    %v2011 = vmax.f32 %v1979, 0.0
    %v2012 = vmax.f32 %v1980, 0.0
    %v2013 = vmax.f32 %v1981, 0.0
    %v2014 = vmax.f32 %v1982, 0.0
    %v2015 = vmax.f32 %v1983, 0.0
    %v2016 = vmax.f32 %v1984, 0.0
    %v2017 = vmax.f32 %v1985, 0.0
    %v2018 = vmax.f32 %v1986, 0.0
    %v2019 = vmax.f32 %v1987, 0.0
    %v2020 = vpack.c.bf16 %v1990, %v1988
    %v2021 = vpack.c.bf16 %v1991, %v1989
    %v2022 = vpack.c.bf16 %v1994, %v1992
    %v2023 = vpack.c.bf16 %v1995, %v1993
    %v2024 = vpack.c.bf16 %v1998, %v1996
    %v2025 = vpack.c.bf16 %v1999, %v1997
    %v2026 = vpack.c.bf16 %v2002, %v2000
    %v2027 = vpack.c.bf16 %v2003, %v2001
    %v2028 = vpack.c.bf16 %v2006, %v2004
    %v2029 = vpack.c.bf16 %v2007, %v2005
    %v2030 = vpack.c.bf16 %v2010, %v2008
    %v2031 = vpack.c.bf16 %v2011, %v2009
    %v2032 = vpack.c.bf16 %v2014, %v2012
    %v2033 = vpack.c.bf16 %v2015, %v2013
    %v2034 = vpack.c.bf16 %v2018, %v2016
    %v2035 = vpack.c.bf16 %v2019, %v2017
    %v2036 = vld [vmem:[%s3] sm:$0xf]
    %v2037 = vld [vmem:[%s3 + $0x4] sm:$0xf]
    %v2038 = vld [vmem:[%s3 + $0x8] sm:$0xf]
    %v2039 = vld [vmem:[%s3 + $0xc] sm:$0xf]
    %v2040 = vld [vmem:[%s3 + $0x10] sm:$0xf]
    %v2041 = vld [vmem:[%s3 + $0x14] sm:$0xf]
    %v2042 = vld [vmem:[%s3 + $0x18] sm:$0xf]
    %v2043 = vld [vmem:[%s3 + $0x1c] sm:$0xf]
    %v2044 = vld [vmem:[%s3 + $0x20] sm:$0xf]
    %v2045 = vld [vmem:[%s3 + $0x24] sm:$0xf]
    %v2046 = vld [vmem:[%s3 + $0x28] sm:$0xf]
    %v2047 = vld [vmem:[%s3 + $0x2c] sm:$0xf]
    %v2048 = vld [vmem:[%s3 + $0x30] sm:$0xf]
    %v2049 = vld [vmem:[%s3 + $0x34] sm:$0xf]
    %v2050 = vld [vmem:[%s3 + $0x38] sm:$0xf]
    %v2051 = vld [vmem:[%s3 + $0x3c] sm:$0xf]
    %v2052 = vld [vmem:[%s3 + $0x40] sm:$0xf]
    %v2053 = vld [vmem:[%s3 + $0x44] sm:$0xf]
    %v2054 = vld [vmem:[%s3 + $0x48] sm:$0xf]
    %v2055 = vld [vmem:[%s3 + $0x4c] sm:$0xf]
    %v2056 = vld [vmem:[%s3 + $0x50] sm:$0xf]
    %v2057 = vld [vmem:[%s3 + $0x54] sm:$0xf]
    %v2058 = vld [vmem:[%s3 + $0x58] sm:$0xf]
    %v2059 = vld [vmem:[%s3 + $0x5c] sm:$0xf]
    %v2060 = vld [vmem:[%s3 + $0x60] sm:$0xf]
    %v2061 = vld [vmem:[%s3 + $0x64] sm:$0xf]
    %v2062 = vld [vmem:[%s3 + $0x68] sm:$0xf]
    %v2063 = vld [vmem:[%s3 + $0x6c] sm:$0xf]
    %v2064 = vld [vmem:[%s3 + $0x70] sm:$0xf]
    %v2065 = vld [vmem:[%s3 + $0x74] sm:$0xf]
    %v2066 = vld [vmem:[%s3 + $0x78] sm:$0xf]
    %v2067 = vld [vmem:[%s3 + $0x7c] sm:$0xf]
    %v2100 = vunpack.c.l.b16 %v2036
    %v2101 = vunpack.c.l.b16 %v2037
    %v2102 = vunpack.c.l.b16 %v2038
    %v2103 = vunpack.c.l.b16 %v2039
    %v2104 = vunpack.c.l.b16 %v2040
    %v2105 = vunpack.c.l.b16 %v2041
    %v2106 = vunpack.c.l.b16 %v2042
    %v2107 = vunpack.c.l.b16 %v2043
    %v2108 = vunpack.c.l.b16 %v2044
    %v2109 = vunpack.c.l.b16 %v2045
    %v2110 = vunpack.c.l.b16 %v2046
    %v2111 = vunpack.c.l.b16 %v2047
    %v2112 = vunpack.c.l.b16 %v2048
    %v2113 = vunpack.c.l.b16 %v2049
    %v2114 = vunpack.c.l.b16 %v2050
    %v2115 = vunpack.c.l.b16 %v2051
    %v2116 = vunpack.c.l.b16 %v2052
    %v2117 = vunpack.c.l.b16 %v2053
    %v2118 = vunpack.c.l.b16 %v2054
    %v2119 = vunpack.c.l.b16 %v2055
    %v2120 = vunpack.c.l.b16 %v2056
    %v2121 = vunpack.c.l.b16 %v2057
    %v2122 = vunpack.c.l.b16 %v2058
    %v2123 = vunpack.c.l.b16 %v2059
    %v2124 = vunpack.c.l.b16 %v2060
    %v2125 = vunpack.c.l.b16 %v2061
    %v2126 = vunpack.c.l.b16 %v2062
    %v2127 = vunpack.c.l.b16 %v2063
    %v2128 = vunpack.c.l.b16 %v2064
    %v2129 = vunpack.c.l.b16 %v2065
    %v2130 = vunpack.c.l.b16 %v2066
    %v2131 = vunpack.c.l.b16 %v2067
    %v2132 = vpack.c.b16 %v2101, %v2100
    %v2133 = vpack.c.b16 %v2103, %v2102
    %v2134 = vpack.c.b16 %v2105, %v2104
    %v2135 = vpack.c.b16 %v2107, %v2106
    %v2136 = vpack.c.b16 %v2109, %v2108
    %v2137 = vpack.c.b16 %v2111, %v2110
    %v2138 = vpack.c.b16 %v2113, %v2112
    %v2139 = vpack.c.b16 %v2115, %v2114
    %v2140 = vpack.c.b16 %v2117, %v2116
    %v2141 = vpack.c.b16 %v2119, %v2118
    %v2142 = vpack.c.b16 %v2121, %v2120
    %v2143 = vpack.c.b16 %v2123, %v2122
    %v2144 = vpack.c.b16 %v2125, %v2124
    %v2145 = vpack.c.b16 %v2127, %v2126
    %v2146 = vpack.c.b16 %v2129, %v2128
    %v2147 = vpack.c.b16 %v2131, %v2130
    %2164 = vmatpush.bf16.msra.mxu0 %v2139
    %2165 = vmatpush.bf16.msra.mxu0 %v2138
    %2166 = vmatpush.bf16.msra.mxu0 %v2137
    %2167 = vmatpush.bf16.msra.mxu0 %v2136
    %2168 = vmatpush.bf16.msra.mxu0 %v2135
    %2169 = vmatpush.bf16.msra.mxu0 %v2134
    %2170 = vmatpush.bf16.msra.mxu0 %v2133
    %2171 = vmatpush.bf16.msra.mxu0 %v2132
    %2172 = vmatmul.bf16.gmra.mxu0 %v2020
    %v2173 = vpop.f32.mrf.mxu0
    %v2174 = vadd.f32 0.0, %v2173
    %v2175 = vpop.f32.mrf.mxu0
    %v2176 = vadd.f32 0.0, %v2175
    %2177 = vmatmul.bf16.gmra.mxu0 %v2022
    %v2178 = vpop.f32.mrf.mxu0
    %v2179 = vadd.f32 0.0, %v2178
    %v2180 = vpop.f32.mrf.mxu0
    %v2181 = vadd.f32 0.0, %v2180
    %2182 = vmatmul.bf16.gmra.mxu0 %v2024
    %v2183 = vpop.f32.mrf.mxu0
    %v2184 = vadd.f32 0.0, %v2183
    %v2185 = vpop.f32.mrf.mxu0
    %v2186 = vadd.f32 0.0, %v2185
    %2187 = vmatmul.bf16.gmra.mxu0 %v2026
    %v2188 = vpop.f32.mrf.mxu0
    %v2189 = vadd.f32 0.0, %v2188
    %v2190 = vpop.f32.mrf.mxu0
    %v2191 = vadd.f32 0.0, %v2190
    %2192 = vmatmul.bf16.gmra.mxu0 %v2028
    %v2193 = vpop.f32.mrf.mxu0
    %v2194 = vadd.f32 0.0, %v2193
    %v2195 = vpop.f32.mrf.mxu0
    %v2196 = vadd.f32 0.0, %v2195
    %2197 = vmatmul.bf16.gmra.mxu0 %v2030
    %v2198 = vpop.f32.mrf.mxu0
    %v2199 = vadd.f32 0.0, %v2198
    %v2200 = vpop.f32.mrf.mxu0
    %v2201 = vadd.f32 0.0, %v2200
    %2202 = vmatmul.bf16.gmra.mxu0 %v2032
    %v2203 = vpop.f32.mrf.mxu0
    %v2204 = vadd.f32 0.0, %v2203
    %v2205 = vpop.f32.mrf.mxu0
    %v2206 = vadd.f32 0.0, %v2205
    %2207 = vmatmul.bf16.gmra.mxu0 %v2034
    %v2208 = vpop.f32.mrf.mxu0
    %v2209 = vadd.f32 0.0, %v2208
    %v2210 = vpop.f32.mrf.mxu0
    %v2211 = vadd.f32 0.0, %v2210
    %2212 = vdwg.mxu0
    %2213 = vmatpush.bf16.msra.mxu0 %v2147
    %2214 = vmatpush.bf16.msra.mxu0 %v2146
    %2215 = vmatpush.bf16.msra.mxu0 %v2145
    %2216 = vmatpush.bf16.msra.mxu0 %v2144
    %2217 = vmatpush.bf16.msra.mxu0 %v2143
    %2218 = vmatpush.bf16.msra.mxu0 %v2142
    %2219 = vmatpush.bf16.msra.mxu0 %v2141
    %2220 = vmatpush.bf16.msra.mxu0 %v2140
    %2221 = vmatmul.bf16.gmra.mxu0 %v2021
    %v2222 = vpop.f32.mrf.mxu0
    %v2223 = vadd.f32 %v2174, %v2222
    %v2224 = vpop.f32.mrf.mxu0
    %v2225 = vadd.f32 %v2176, %v2224
    %2226 = vmatmul.bf16.gmra.mxu0 %v2023
    %v2227 = vpop.f32.mrf.mxu0
    %v2228 = vadd.f32 %v2179, %v2227
    %v2229 = vpop.f32.mrf.mxu0
    %v2230 = vadd.f32 %v2181, %v2229
    %2231 = vmatmul.bf16.gmra.mxu0 %v2025
    %v2232 = vpop.f32.mrf.mxu0
    %v2233 = vadd.f32 %v2184, %v2232
    %v2234 = vpop.f32.mrf.mxu0
    %v2235 = vadd.f32 %v2186, %v2234
    %2236 = vmatmul.bf16.gmra.mxu0 %v2027
    %v2237 = vpop.f32.mrf.mxu0
    %v2238 = vadd.f32 %v2189, %v2237
    %v2239 = vpop.f32.mrf.mxu0
    %v2240 = vadd.f32 %v2191, %v2239
    %2241 = vmatmul.bf16.gmra.mxu0 %v2029
    %v2242 = vpop.f32.mrf.mxu0
    %v2243 = vadd.f32 %v2194, %v2242
    %v2244 = vpop.f32.mrf.mxu0
    %v2245 = vadd.f32 %v2196, %v2244
    %2246 = vmatmul.bf16.gmra.mxu0 %v2031
    %v2247 = vpop.f32.mrf.mxu0
    %v2248 = vadd.f32 %v2199, %v2247
    %v2249 = vpop.f32.mrf.mxu0
    %v2250 = vadd.f32 %v2201, %v2249
    %2251 = vmatmul.bf16.gmra.mxu0 %v2033
    %v2252 = vpop.f32.mrf.mxu0
    %v2253 = vadd.f32 %v2204, %v2252
    %v2254 = vpop.f32.mrf.mxu0
    %v2255 = vadd.f32 %v2206, %v2254
    %2256 = vmatmul.bf16.gmra.mxu0 %v2035
    %v2257 = vpop.f32.mrf.mxu0
    %v2258 = vadd.f32 %v2209, %v2257
    %v2259 = vpop.f32.mrf.mxu0
    %v2260 = vadd.f32 %v2211, %v2259
    %2261 = vdwg.mxu0
    %v2262 = vld [vmem:[%s6 + $0x4] ss:$0 sm:$0xff]
    %v2263 = vld [vmem:[%s6 + $0x5] ss:$0 sm:$0xff]
    %2264 = vmatpush.msra.mxu0 %v2260
    %2265 = vmatpush.msra.mxu0 %v2258
    %2266 = vmatpush.msra.mxu0 %v2255
    %2267 = vmatpush.msra.mxu0 %v2253
    %2268 = vmatpush.msra.mxu0 %v2250
    %2269 = vmatpush.msra.mxu0 %v2248
    %2270 = vmatpush.msra.mxu0 %v2245
    %2271 = vmatpush.msra.mxu0 %v2243
    %2272 = vmatpush.msra.mxu0 %v2240
    %2273 = vmatpush.msra.mxu0 %v2238
    %2274 = vmatpush.msra.mxu0 %v2235
    %2275 = vmatpush.msra.mxu0 %v2233
    %2276 = vmatpush.msra.mxu0 %v2230
    %2277 = vmatpush.msra.mxu0 %v2228
    %2278 = vmatpush.msra.mxu0 %v2225
    %2279 = vmatpush.msra.mxu0 %v2223
    %2280 = vmatmul.f32.gmra.mxu0 1.0
    %v2281 = vpop.f32.mrf.mxu0
    %v2282 = vadd.f32 0.0, %v2281
    %2283 = vdwg.mxu0
    %v2284 = vmul.f32 %v2282, 0.0078125
    %v2285 = vperm.slane %v2284, 0
    %v2286 = vsub.f32 %v2223, %v2285
    %v2287 = vsub.f32 %v2225, %v2285
    %v2288 = vsub.f32 %v2228, %v2285
    %v2289 = vsub.f32 %v2230, %v2285
    %v2290 = vsub.f32 %v2233, %v2285
    %v2291 = vsub.f32 %v2235, %v2285
    %v2292 = vsub.f32 %v2238, %v2285
    %v2293 = vsub.f32 %v2240, %v2285
    %v2294 = vsub.f32 %v2243, %v2285
    %v2295 = vsub.f32 %v2245, %v2285
    %v2296 = vsub.f32 %v2248, %v2285
    %v2297 = vsub.f32 %v2250, %v2285
    %v2298 = vsub.f32 %v2253, %v2285
    %v2299 = vsub.f32 %v2255, %v2285
    %v2300 = vsub.f32 %v2258, %v2285
    %v2301 = vsub.f32 %v2260, %v2285
    %v2302 = vmul.f32 %v2286, %v2286
    %v2303 = vmul.f32 %v2287, %v2287
    %v2304 = vmul.f32 %v2288, %v2288
    %v2305 = vmul.f32 %v2289, %v2289
    %v2306 = vmul.f32 %v2290, %v2290
    %v2307 = vmul.f32 %v2291, %v2291
    %v2308 = vmul.f32 %v2292, %v2292
    %v2309 = vmul.f32 %v2293, %v2293
    %v2310 = vmul.f32 %v2294, %v2294
    %v2311 = vmul.f32 %v2295, %v2295
    %v2312 = vmul.f32 %v2296, %v2296
    %v2313 = vmul.f32 %v2297, %v2297
    %v2314 = vmul.f32 %v2298, %v2298
    %v2315 = vmul.f32 %v2299, %v2299
    %v2316 = vmul.f32 %v2300, %v2300
    %v2317 = vmul.f32 %v2301, %v2301
    %2318 = vmatpush.msra.mxu0 %v2317
    %2319 = vmatpush.msra.mxu0 %v2316
    %2320 = vmatpush.msra.mxu0 %v2315
    %2321 = vmatpush.msra.mxu0 %v2314
    %2322 = vmatpush.msra.mxu0 %v2313
    %2323 = vmatpush.msra.mxu0 %v2312
    %2324 = vmatpush.msra.mxu0 %v2311
    %2325 = vmatpush.msra.mxu0 %v2310
    %2326 = vmatpush.msra.mxu0 %v2309
    %2327 = vmatpush.msra.mxu0 %v2308
    %2328 = vmatpush.msra.mxu0 %v2307
    %2329 = vmatpush.msra.mxu0 %v2306
    %2330 = vmatpush.msra.mxu0 %v2305
    %2331 = vmatpush.msra.mxu0 %v2304
    %2332 = vmatpush.msra.mxu0 %v2303
    %2333 = vmatpush.msra.mxu0 %v2302
    %2334 = vmatmul.f32.gmra.mxu0 1.0
    %v2335 = vpop.f32.mrf.mxu0
    %v2336 = vadd.f32 0.0, %v2335
    %2337 = vdwg.mxu0
    %v2338 = vmul.f32 %v2336, 0.0078125
    %v2339 = vadd.f32 %v2338, 1e-05
    %v2340 = vrsqrt.pop %v2339
    %v2341 = vmul.f32 %v2340, %v2339
    %v2342 = vmul.f32 %v2341, %v2340
    %v2343 = vmul.f32 0.5, %v2342
    %v2344 = vsub.f32 1.5, %v2343
    %v2345 = vmul.f32 %v2340, %v2344
    %vm2346 = vweird.f32 %v2339
    %vm2347 = vweird.f32 %v2340
    %vm2348 = vmor %vm2346, %vm2347
    %v2349 = vsel %vm2348, %v2340, %v2345
    %v2350 = vmul.f32 %v2262, %v2349
    %v2351 = vperm.slane %v2350, 0
    %v2352 = vmul.f32 %v2286, %v2351
    %v2353 = vmul.f32 %v2287, %v2351
    %v2354 = vmul.f32 %v2288, %v2351
    %v2355 = vmul.f32 %v2289, %v2351
    %v2356 = vmul.f32 %v2290, %v2351
    %v2357 = vmul.f32 %v2291, %v2351
    %v2358 = vmul.f32 %v2292, %v2351
    %v2359 = vmul.f32 %v2293, %v2351
    %v2360 = vmul.f32 %v2294, %v2351
    %v2361 = vmul.f32 %v2295, %v2351
    %v2362 = vmul.f32 %v2296, %v2351
    %v2363 = vmul.f32 %v2297, %v2351
    %v2364 = vmul.f32 %v2298, %v2351
    %v2365 = vmul.f32 %v2299, %v2351
    %v2366 = vmul.f32 %v2300, %v2351
    %v2367 = vmul.f32 %v2301, %v2351
    %v2368 = vadd.f32 %v2352, %v2263
    %v2369 = vadd.f32 %v2353, %v2263
    %v2370 = vadd.f32 %v2354, %v2263
    %v2371 = vadd.f32 %v2355, %v2263
    %v2372 = vadd.f32 %v2356, %v2263
    %v2373 = vadd.f32 %v2357, %v2263
    %v2374 = vadd.f32 %v2358, %v2263
    %v2375 = vadd.f32 %v2359, %v2263
    %v2376 = vadd.f32 %v2360, %v2263
    %v2377 = vadd.f32 %v2361, %v2263
    %v2378 = vadd.f32 %v2362, %v2263
    %v2379 = vadd.f32 %v2363, %v2263
    %v2380 = vadd.f32 %v2364, %v2263
    %v2381 = vadd.f32 %v2365, %v2263
    %v2382 = vadd.f32 %v2366, %v2263
    %v2383 = vadd.f32 %v2367, %v2263
    %v2384 = vmax.f32 %v2368, 0.0
    %v2385 = vmax.f32 %v2369, 0.0
    %v2386 = vmax.f32 %v2370, 0.0
    %v2387 = vmax.f32 %v2371, 0.0
    %v2388 = vmax.f32 %v2372, 0.0
    %v2389 = vmax.f32 %v2373, 0.0
    %v2390 = vmax.f32 %v2374, 0.0
    %v2391 = vmax.f32 %v2375, 0.0
    %v2392 = vmax.f32 %v2376, 0.0
    %v2393 = vmax.f32 %v2377, 0.0
    %v2394 = vmax.f32 %v2378, 0.0
    %v2395 = vmax.f32 %v2379, 0.0
    %v2396 = vmax.f32 %v2380, 0.0
    %v2397 = vmax.f32 %v2381, 0.0
    %v2398 = vmax.f32 %v2382, 0.0
    %v2399 = vmax.f32 %v2383, 0.0
    %v2400 = vpack.c.bf16 %v2385, %v2384
    %v2401 = vpack.c.bf16 %v2387, %v2386
    %v2402 = vpack.c.bf16 %v2389, %v2388
    %v2403 = vpack.c.bf16 %v2391, %v2390
    %v2404 = vpack.c.bf16 %v2393, %v2392
    %v2405 = vpack.c.bf16 %v2395, %v2394
    %v2406 = vpack.c.bf16 %v2397, %v2396
    %v2407 = vpack.c.bf16 %v2399, %v2398
    %v2408 = vld [vmem:[%s4] sm:$0xf]
    %v2409 = vld [vmem:[%s4 + $0x4] sm:$0xf]
    %v2410 = vld [vmem:[%s4 + $0x8] sm:$0xf]
    %v2411 = vld [vmem:[%s4 + $0xc] sm:$0xf]
    %v2412 = vld [vmem:[%s4 + $0x10] sm:$0xf]
    %v2413 = vld [vmem:[%s4 + $0x14] sm:$0xf]
    %v2414 = vld [vmem:[%s4 + $0x18] sm:$0xf]
    %v2415 = vld [vmem:[%s4 + $0x1c] sm:$0xf]
    %v2416 = vld [vmem:[%s4 + $0x20] sm:$0xf]
    %v2417 = vld [vmem:[%s4 + $0x24] sm:$0xf]
    %v2418 = vld [vmem:[%s4 + $0x28] sm:$0xf]
    %v2419 = vld [vmem:[%s4 + $0x2c] sm:$0xf]
    %v2420 = vld [vmem:[%s4 + $0x30] sm:$0xf]
    %v2421 = vld [vmem:[%s4 + $0x34] sm:$0xf]
    %v2422 = vld [vmem:[%s4 + $0x38] sm:$0xf]
    %v2423 = vld [vmem:[%s4 + $0x3c] sm:$0xf]
    %v2440 = vunpack.c.l.b16 %v2408
    %v2441 = vunpack.c.l.b16 %v2409
    %v2442 = vunpack.c.l.b16 %v2410
    %v2443 = vunpack.c.l.b16 %v2411
    %v2444 = vunpack.c.l.b16 %v2412
    %v2445 = vunpack.c.l.b16 %v2413
    %v2446 = vunpack.c.l.b16 %v2414
    %v2447 = vunpack.c.l.b16 %v2415
    %v2448 = vunpack.c.l.b16 %v2416
    %v2449 = vunpack.c.l.b16 %v2417
    %v2450 = vunpack.c.l.b16 %v2418
    %v2451 = vunpack.c.l.b16 %v2419
    %v2452 = vunpack.c.l.b16 %v2420
    %v2453 = vunpack.c.l.b16 %v2421
    %v2454 = vunpack.c.l.b16 %v2422
    %v2455 = vunpack.c.l.b16 %v2423
    %v2456 = vpack.c.b16 %v2441, %v2440
    %v2457 = vpack.c.b16 %v2443, %v2442
    %v2458 = vpack.c.b16 %v2445, %v2444
    %v2459 = vpack.c.b16 %v2447, %v2446
    %v2460 = vpack.c.b16 %v2449, %v2448
    %v2461 = vpack.c.b16 %v2451, %v2450
    %v2462 = vpack.c.b16 %v2453, %v2452
    %v2463 = vpack.c.b16 %v2455, %v2454
    %2472 = vmatpush.bf16.msra.mxu0 %v2463
    %2473 = vmatpush.bf16.msra.mxu0 %v2462
    %2474 = vmatpush.bf16.msra.mxu0 %v2461
    %2475 = vmatpush.bf16.msra.mxu0 %v2460
    %2476 = vmatpush.bf16.msra.mxu0 %v2459
    %2477 = vmatpush.bf16.msra.mxu0 %v2458
    %2478 = vmatpush.bf16.msra.mxu0 %v2457
    %2479 = vmatpush.bf16.msra.mxu0 %v2456
    %2480 = vmatmul.bf16.gmra.mxu0 %v2400
    %v2481 = vpop.f32.mrf.mxu0
    %v2482 = vadd.f32 0.0, %v2481
    %v2483 = vpop.f32.mrf.mxu0
    %v2484 = vadd.f32 0.0, %v2483
    %2485 = vmatmul.bf16.gmra.mxu0 %v2401
    %v2486 = vpop.f32.mrf.mxu0
    %v2487 = vadd.f32 0.0, %v2486
    %v2488 = vpop.f32.mrf.mxu0
    %v2489 = vadd.f32 0.0, %v2488
    %2490 = vmatmul.bf16.gmra.mxu0 %v2402
    %v2491 = vpop.f32.mrf.mxu0
    %v2492 = vadd.f32 0.0, %v2491
    %v2493 = vpop.f32.mrf.mxu0
    %v2494 = vadd.f32 0.0, %v2493
    %2495 = vmatmul.bf16.gmra.mxu0 %v2403
    %v2496 = vpop.f32.mrf.mxu0
    %v2497 = vadd.f32 0.0, %v2496
    %v2498 = vpop.f32.mrf.mxu0
    %v2499 = vadd.f32 0.0, %v2498
    %2500 = vmatmul.bf16.gmra.mxu0 %v2404
    %v2501 = vpop.f32.mrf.mxu0
    %v2502 = vadd.f32 0.0, %v2501
    %v2503 = vpop.f32.mrf.mxu0
    %v2504 = vadd.f32 0.0, %v2503
    %2505 = vmatmul.bf16.gmra.mxu0 %v2405
    %v2506 = vpop.f32.mrf.mxu0
    %v2507 = vadd.f32 0.0, %v2506
    %v2508 = vpop.f32.mrf.mxu0
    %v2509 = vadd.f32 0.0, %v2508
    %2510 = vmatmul.bf16.gmra.mxu0 %v2406
    %v2511 = vpop.f32.mrf.mxu0
    %v2512 = vadd.f32 0.0, %v2511
    %v2513 = vpop.f32.mrf.mxu0
    %v2514 = vadd.f32 0.0, %v2513
    %2515 = vmatmul.bf16.gmra.mxu0 %v2407
    %v2516 = vpop.f32.mrf.mxu0
    %v2517 = vadd.f32 0.0, %v2516
    %v2518 = vpop.f32.mrf.mxu0
    %v2519 = vadd.f32 0.0, %v2518
    %2520 = vdwg.mxu0
    %v2521 = vld [vmem:[%s6 + $0x6] ss:$0 sm:$0xff]
    %v2522 = vld [vmem:[%s6 + $0x7] ss:$0 sm:$0xff]
    %2523 = vmatpush.msra.mxu0 %v2519
    %2524 = vmatpush.msra.mxu0 %v2517
    %2525 = vmatpush.msra.mxu0 %v2514
    %2526 = vmatpush.msra.mxu0 %v2512
    %2527 = vmatpush.msra.mxu0 %v2509
    %2528 = vmatpush.msra.mxu0 %v2507
    %2529 = vmatpush.msra.mxu0 %v2504
    %2530 = vmatpush.msra.mxu0 %v2502
    %2531 = vmatpush.msra.mxu0 %v2499
    %2532 = vmatpush.msra.mxu0 %v2497
    %2533 = vmatpush.msra.mxu0 %v2494
    %2534 = vmatpush.msra.mxu0 %v2492
    %2535 = vmatpush.msra.mxu0 %v2489
    %2536 = vmatpush.msra.mxu0 %v2487
    %2537 = vmatpush.msra.mxu0 %v2484
    %2538 = vmatpush.msra.mxu0 %v2482
    %2539 = vmatmul.f32.gmra.mxu0 1.0
    %v2540 = vpop.f32.mrf.mxu0
    %v2541 = vadd.f32 0.0, %v2540
    %2542 = vdwg.mxu0
    %v2543 = vmul.f32 %v2541, 0.0078125
    %v2544 = vperm.slane %v2543, 0
    %v2545 = vsub.f32 %v2482, %v2544
    %v2546 = vsub.f32 %v2484, %v2544
    %v2547 = vsub.f32 %v2487, %v2544
    %v2548 = vsub.f32 %v2489, %v2544
    %v2549 = vsub.f32 %v2492, %v2544
    %v2550 = vsub.f32 %v2494, %v2544
    %v2551 = vsub.f32 %v2497, %v2544
    %v2552 = vsub.f32 %v2499, %v2544
    %v2553 = vsub.f32 %v2502, %v2544
    %v2554 = vsub.f32 %v2504, %v2544
    %v2555 = vsub.f32 %v2507, %v2544
    %v2556 = vsub.f32 %v2509, %v2544
    %v2557 = vsub.f32 %v2512, %v2544
    %v2558 = vsub.f32 %v2514, %v2544
    %v2559 = vsub.f32 %v2517, %v2544
    %v2560 = vsub.f32 %v2519, %v2544
    %v2561 = vmul.f32 %v2545, %v2545
    %v2562 = vmul.f32 %v2546, %v2546
    %v2563 = vmul.f32 %v2547, %v2547
    %v2564 = vmul.f32 %v2548, %v2548
    %v2565 = vmul.f32 %v2549, %v2549
    %v2566 = vmul.f32 %v2550, %v2550
    %v2567 = vmul.f32 %v2551, %v2551
    %v2568 = vmul.f32 %v2552, %v2552
    %v2569 = vmul.f32 %v2553, %v2553
    %v2570 = vmul.f32 %v2554, %v2554
    %v2571 = vmul.f32 %v2555, %v2555
    %v2572 = vmul.f32 %v2556, %v2556
    %v2573 = vmul.f32 %v2557, %v2557
    %v2574 = vmul.f32 %v2558, %v2558
    %v2575 = vmul.f32 %v2559, %v2559
    %v2576 = vmul.f32 %v2560, %v2560
    %2577 = vmatpush.msra.mxu0 %v2576
    %2578 = vmatpush.msra.mxu0 %v2575
    %2579 = vmatpush.msra.mxu0 %v2574
    %2580 = vmatpush.msra.mxu0 %v2573
    %2581 = vmatpush.msra.mxu0 %v2572
    %2582 = vmatpush.msra.mxu0 %v2571
    %2583 = vmatpush.msra.mxu0 %v2570
    %2584 = vmatpush.msra.mxu0 %v2569
    %2585 = vmatpush.msra.mxu0 %v2568
    %2586 = vmatpush.msra.mxu0 %v2567
    %2587 = vmatpush.msra.mxu0 %v2566
    %2588 = vmatpush.msra.mxu0 %v2565
    %2589 = vmatpush.msra.mxu0 %v2564
    %2590 = vmatpush.msra.mxu0 %v2563
    %2591 = vmatpush.msra.mxu0 %v2562
    %2592 = vmatpush.msra.mxu0 %v2561
    %2593 = vmatmul.f32.gmra.mxu0 1.0
    %v2594 = vpop.f32.mrf.mxu0
    %v2595 = vadd.f32 0.0, %v2594
    %2596 = vdwg.mxu0
    %v2597 = vmul.f32 %v2595, 0.0078125
    %v2598 = vadd.f32 %v2597, 1e-05
    %v2599 = vrsqrt.pop %v2598
    %v2600 = vmul.f32 %v2599, %v2598
    %v2601 = vmul.f32 %v2600, %v2599
    %v2602 = vmul.f32 0.5, %v2601
    %v2603 = vsub.f32 1.5, %v2602
    %v2604 = vmul.f32 %v2599, %v2603
    %vm2605 = vweird.f32 %v2598
    %vm2606 = vweird.f32 %v2599
    %vm2607 = vmor %vm2605, %vm2606
    %v2608 = vsel %vm2607, %v2599, %v2604
    %v2609 = vmul.f32 %v2521, %v2608
    %v2610 = vperm.slane %v2609, 0
    %v2611 = vmul.f32 %v2545, %v2610
    %v2612 = vmul.f32 %v2546, %v2610
    %v2613 = vmul.f32 %v2547, %v2610
    %v2614 = vmul.f32 %v2548, %v2610
    %v2615 = vmul.f32 %v2549, %v2610
    %v2616 = vmul.f32 %v2550, %v2610
    %v2617 = vmul.f32 %v2551, %v2610
    %v2618 = vmul.f32 %v2552, %v2610
    %v2619 = vmul.f32 %v2553, %v2610
    %v2620 = vmul.f32 %v2554, %v2610
    %v2621 = vmul.f32 %v2555, %v2610
    %v2622 = vmul.f32 %v2556, %v2610
    %v2623 = vmul.f32 %v2557, %v2610
    %v2624 = vmul.f32 %v2558, %v2610
    %v2625 = vmul.f32 %v2559, %v2610
    %v2626 = vmul.f32 %v2560, %v2610
    %v2627 = vadd.f32 %v2611, %v2522
    %v2628 = vadd.f32 %v2612, %v2522
    %v2629 = vadd.f32 %v2613, %v2522
    %v2630 = vadd.f32 %v2614, %v2522
    %v2631 = vadd.f32 %v2615, %v2522
    %v2632 = vadd.f32 %v2616, %v2522
    %v2633 = vadd.f32 %v2617, %v2522
    %v2634 = vadd.f32 %v2618, %v2522
    %v2635 = vadd.f32 %v2619, %v2522
    %v2636 = vadd.f32 %v2620, %v2522
    %v2637 = vadd.f32 %v2621, %v2522
    %v2638 = vadd.f32 %v2622, %v2522
    %v2639 = vadd.f32 %v2623, %v2522
    %v2640 = vadd.f32 %v2624, %v2522
    %v2641 = vadd.f32 %v2625, %v2522
    %v2642 = vadd.f32 %v2626, %v2522
    %v2643 = vmax.f32 %v2627, 0.0
    %v2644 = vmax.f32 %v2628, 0.0
    %v2645 = vmax.f32 %v2629, 0.0
    %v2646 = vmax.f32 %v2630, 0.0
    %v2647 = vmax.f32 %v2631, 0.0
    %v2648 = vmax.f32 %v2632, 0.0
    %v2649 = vmax.f32 %v2633, 0.0
    %v2650 = vmax.f32 %v2634, 0.0
    %v2651 = vmax.f32 %v2635, 0.0
    %v2652 = vmax.f32 %v2636, 0.0
    %v2653 = vmax.f32 %v2637, 0.0
    %v2654 = vmax.f32 %v2638, 0.0
    %v2655 = vmax.f32 %v2639, 0.0
    %v2656 = vmax.f32 %v2640, 0.0
    %v2657 = vmax.f32 %v2641, 0.0
    %v2658 = vmax.f32 %v2642, 0.0
    %v2659 = vpack.c.bf16 %v2644, %v2643
    %v2660 = vpack.c.bf16 %v2646, %v2645
    %v2661 = vpack.c.bf16 %v2648, %v2647
    %v2662 = vpack.c.bf16 %v2650, %v2649
    %v2663 = vpack.c.bf16 %v2652, %v2651
    %v2664 = vpack.c.bf16 %v2654, %v2653
    %v2665 = vpack.c.bf16 %v2656, %v2655
    %v2666 = vpack.c.bf16 %v2658, %v2657
    %v2667 = vld [vmem:[%s6 + $0x20] ss:$0 sm:$0xff]
    %v2668 = vld [vmem:[#allocation4] sm:$0xf]
    %v2669 = vld [vmem:[#allocation4 + $0x4] sm:$0xf]
    %v2670 = vld [vmem:[#allocation4 + $0x8] sm:$0xf]
    %v2671 = vld [vmem:[#allocation4 + $0xc] sm:$0xf]
    %v2672 = vld [vmem:[#allocation4 + $0x10] sm:$0xf]
    %v2673 = vld [vmem:[#allocation4 + $0x14] sm:$0xf]
    %v2674 = vld [vmem:[#allocation4 + $0x18] sm:$0xf]
    %v2675 = vld [vmem:[#allocation4 + $0x1c] sm:$0xf]
    %v2684 = vunpack.c.l.b16 %v2668
    %v2685 = vunpack.c.l.b16 %v2669
    %v2686 = vunpack.c.l.b16 %v2670
    %v2687 = vunpack.c.l.b16 %v2671
    %v2688 = vunpack.c.l.b16 %v2672
    %v2689 = vunpack.c.l.b16 %v2673
    %v2690 = vunpack.c.l.b16 %v2674
    %v2691 = vunpack.c.l.b16 %v2675
    %v2692 = vpack.c.b16 %v2685, %v2684
    %v2693 = vpack.c.b16 %v2687, %v2686
    %v2694 = vpack.c.b16 %v2689, %v2688
    %v2695 = vpack.c.b16 %v2691, %v2690
    %vm2700 = vcmask 523264
    %v2702 = vsel %vm2700, %v2659, 0
    %v2705 = vsel %vm2700, %v2660, 0
    %v2708 = vsel %vm2700, %v2661, 0
    %v2711 = vsel %vm2700, %v2662, 0
    %v2714 = vsel %vm2700, %v2663, 0
    %v2717 = vsel %vm2700, %v2664, 0
    %v2720 = vsel %vm2700, %v2665, 0
    %v2723 = vsel %vm2700, %v2666, 0
    %2725 = vmatpush.bf16.msra.mxu0 0
    %2726 = vmatpush.bf16.msra.mxu0 0
    %2727 = vmatpush.bf16.msra.mxu0 0
    %2728 = vmatpush.bf16.msra.mxu0 0
    %2729 = vmatpush.bf16.msra.mxu0 %v2695
    %2730 = vmatpush.bf16.msra.mxu0 %v2694
    %2731 = vmatpush.bf16.msra.mxu0 %v2693
    %2732 = vmatpush.bf16.msra.mxu0 %v2692
    %2733 = vmatmul.bf16.gmra.mxu0 %v2702
    %v2734 = vpop.f32.mrf.mxu0
    %v2735 = vadd.f32 %v2667, %v2734
    %v2736 = vpop.f32.mrf.mxu0
    %v2737 = vadd.f32 %v2667, %v2736
    %2738 = vmatmul.bf16.gmra.mxu0 %v2705
    %v2739 = vpop.f32.mrf.mxu0
    %v2740 = vadd.f32 %v2667, %v2739
    %v2741 = vpop.f32.mrf.mxu0
    %v2742 = vadd.f32 %v2667, %v2741
    %2743 = vmatmul.bf16.gmra.mxu0 %v2708
    %v2744 = vpop.f32.mrf.mxu0
    %v2745 = vadd.f32 %v2667, %v2744
    %v2746 = vpop.f32.mrf.mxu0
    %v2747 = vadd.f32 %v2667, %v2746
    %2748 = vmatmul.bf16.gmra.mxu0 %v2711
    %v2749 = vpop.f32.mrf.mxu0
    %v2750 = vadd.f32 %v2667, %v2749
    %v2751 = vpop.f32.mrf.mxu0
    %v2752 = vadd.f32 %v2667, %v2751
    %2753 = vmatmul.bf16.gmra.mxu0 %v2714
    %v2754 = vpop.f32.mrf.mxu0
    %v2755 = vadd.f32 %v2667, %v2754
    %v2756 = vpop.f32.mrf.mxu0
    %v2757 = vadd.f32 %v2667, %v2756
    %2758 = vmatmul.bf16.gmra.mxu0 %v2717
    %v2759 = vpop.f32.mrf.mxu0
    %v2760 = vadd.f32 %v2667, %v2759
    %v2761 = vpop.f32.mrf.mxu0
    %v2762 = vadd.f32 %v2667, %v2761
    %2763 = vmatmul.bf16.gmra.mxu0 %v2720
    %v2764 = vpop.f32.mrf.mxu0
    %v2765 = vadd.f32 %v2667, %v2764
    %v2766 = vpop.f32.mrf.mxu0
    %v2767 = vadd.f32 %v2667, %v2766
    %2768 = vmatmul.bf16.gmra.mxu0 %v2723
    %v2769 = vpop.f32.mrf.mxu0
    %v2770 = vadd.f32 %v2667, %v2769
    %v2771 = vpop.f32.mrf.mxu0
    %v2772 = vadd.f32 %v2667, %v2771
    %2773 = vdwg.mxu0
    %2774 = vst [vmem:[%s7] sm:$0xff] %v2735
    %2775 = vst [vmem:[%s7 + $0x8] sm:$0xff] %v2737
    %2776 = vst [vmem:[%s7 + $0x10] sm:$0xff] %v2740
    %2777 = vst [vmem:[%s7 + $0x18] sm:$0xff] %v2742
    %2778 = vst [vmem:[%s7 + $0x20] sm:$0xff] %v2745
    %2779 = vst [vmem:[%s7 + $0x28] sm:$0xff] %v2747
    %2780 = vst [vmem:[%s7 + $0x30] sm:$0xff] %v2750
    %2781 = vst [vmem:[%s7 + $0x38] sm:$0xff] %v2752
    %2782 = vst [vmem:[%s7 + $0x40] sm:$0xff] %v2755
    %2783 = vst [vmem:[%s7 + $0x48] sm:$0xff] %v2757
    %2784 = vst [vmem:[%s7 + $0x50] sm:$0xff] %v2760
    %2785 = vst [vmem:[%s7 + $0x58] sm:$0xff] %v2762
    %2786 = vst [vmem:[%s7 + $0x60] sm:$0xff] %v2765
    %2787 = vst [vmem:[%s7 + $0x68] sm:$0xff] %v2767
    %2788 = vst [vmem:[%s7 + $0x70] sm:$0xff] %v2770
    %2789 = vst [vmem:[%s7 + $0x78] sm:$0xff] %v2772
    // Predicated region
    $region38: #{base_model_forward.1} parent=1 // pred_check
      _
    $region39: #{base_model_forward.1} parent=1 // pred_check_branch
      %2791 = sbr.rel (0) target = $region41
    $region40: #{base_model_forward.1} parent=1 // pred_region
      _
    $region41: #{base_model_forward.1} parent=1 // pred_fallthru
      _
    // Predicated region
    $region42: #{base_model_forward.1} parent=1 // pred_check
      _
    $region43: #{base_model_forward.1} parent=1 // pred_check_branch
      %2793 = sbr.rel (0) target = $region45
    $region44: #{base_model_forward.1} parent=1 // pred_region
      _
    $region45: #{base_model_forward.1} parent=1 // pred_fallthru
      _
    %2794 = vsyncpa [#allocation3], 1
    %2795 = vsyncpa [#allocation5], 1

</llo_original>
